<compile_context>
chip_gen: v5e
topology: v5e:2x2
jax: 0.10.0
libtpu: 0.0.40
codegen_flags: <defaults>
</compile_context>

<pallas_src>
import functools
import math

import jax
import jax.numpy as jnp
import numpy as np
from jax.experimental import pallas as pl
from jax.experimental.pallas import tpu as pltpu

H = 128            # LSTM hidden size (nhe / ehe / nfe)
ATT = 64           # attention size
N_HEADS = 4
HEAD = ATT // N_HEADS
FEAT = 6 + 4 + 9   # rel_state_dim + edge_type_dim + 9 (location one-hot)


def _vmem_specs(n):
    return [pl.BlockSpec(memory_space=pltpu.MemorySpace.VMEM) for _ in range(n)]


def _lstm_cell(gates, c):
    """PyTorch LSTM cell update from pre-activation gates [i, f, g, o]."""
    i = jax.nn.sigmoid(gates[:, 0 * H:1 * H])
    f = jax.nn.sigmoid(gates[:, 1 * H:2 * H])
    g = jnp.tanh(gates[:, 2 * H:3 * H])
    o = jax.nn.sigmoid(gates[:, 3 * H:4 * H])
    c_new = f * c + i * g
    h_new = o * jnp.tanh(c_new)
    return h_new, c_new


# ----------------------------------------------------------------------------
# Kernel 1: NodeHistoryEncoder — LSTM(6 -> 128) over the ego history, last hidden.
# Input x is time-major flattened: row t*B + b.
# ----------------------------------------------------------------------------
def _nhe_kernel(x_ref, wih_ref, whh_ref, b_ref, out_ref, xg_sc, *, T, B):
    # one input-projection matmul for all timesteps
    xg_sc[...] = jnp.dot(x_ref[...], wih_ref[...],
                         preferred_element_type=jnp.float32) + b_ref[...]
    h = jnp.zeros((B, H), jnp.float32)
    c = jnp.zeros((B, H), jnp.float32)
    for t in range(T):                                   # unrolled at trace time
        gates = xg_sc[t * B:(t + 1) * B, :] + jnp.dot(
            h, whh_ref[...], preferred_element_type=jnp.float32)
        h, c = _lstm_cell(gates, c)
    out_ref[...] = h


def nhe_forward(x2d, T, B, p):
    return pl.pallas_call(
        functools.partial(_nhe_kernel, T=T, B=B),
        out_shape=jax.ShapeDtypeStruct((B, H), jnp.float32),
        in_specs=_vmem_specs(4),
        out_specs=pl.BlockSpec(memory_space=pltpu.MemorySpace.VMEM),
        scratch_shapes=[pltpu.VMEM((T * B, 4 * H), jnp.float32)],
    )(x2d, p['nhe_wih'], p['nhe_whh'], p['nhe_b'])


# ----------------------------------------------------------------------------
# Kernel 2: fused MaskedEdgeHistoryEncoder:
#   edge fusion linear + k/q/v projections (batched over all samples)
#   + per-sample masked 4-head attention over the 9 edges
#   + LSTM(64 -> 128) over time + output Linear(128 -> 64).
# ----------------------------------------------------------------------------
def _ehe_kernel(ef_ref, si_ref, mk_ref,
                wf_ref, bf_ref, wk_ref, wq_ref, wv_ref, sel_ref, selT_ref,
                wih_ref, whh_ref, b_ref, wo_ref, bo_ref,
                out_ref,
                q_sc, v_sc, k_sc, att_sc, xg_sc, *, T, B):
    inv_sqrt = 1.0 / math.sqrt(HEAD)
    N = T * B

    # ---- batched projections over all (t, b) samples and their 9 edges ----
    e = jnp.dot(ef_ref[...], wf_ref[...],
                preferred_element_type=jnp.float32) + bf_ref[...]          # (9N, 64)
    q_sc[...] = jnp.dot(e, wq_ref[...], preferred_element_type=jnp.float32)
    v_sc[...] = jnp.dot(e, wv_ref[...], preferred_element_type=jnp.float32)
    k_sc[...] = jnp.dot(si_ref[...], wk_ref[...],
                        preferred_element_type=jnp.float32)                # (N, 64)

    # ---- masked multi-head attention, one sample (= one (t, b) pair) at a time ----
    for n in range(N):                                   # unrolled at trace time
        q_n = q_sc[n * 9:(n + 1) * 9, :]                 # (9, 64)
        v_n = v_sc[n * 9:(n + 1) * 9, :]                 # (9, 64)
        k_n = k_sc[n:n + 1, :]                           # (1, 64) -> broadcast over 9 edges
        m_n = mk_ref[n * 9:(n + 1) * 9, :]               # (9, 1)
        # per-head dot(key, query) via the constant head-selector matmul
        sc = jnp.dot(k_n * q_n, sel_ref[...],
                     preferred_element_type=jnp.float32) * inv_sqrt        # (9, 4)
        sc = jnp.where(m_n > 0.5, sc, -1e10)
        mx = jnp.max(sc, axis=0, keepdims=True)
        pe = jnp.exp(sc - mx)
        pw = pe * pl.reciprocal(jnp.sum(pe, axis=0, keepdims=True), approx=True)
        # expand head weights back to 64 lanes and take the weighted edge sum
        w64 = jnp.dot(pw, selT_ref[...], preferred_element_type=jnp.float32)  # (9, 64)
        att_sc[n:n + 1, :] = jnp.sum(w64 * v_n, axis=0, keepdims=True)        # (1, 64)

    # ---- LSTM over time (batch B), input projection batched over all steps ----
    xg_sc[...] = jnp.dot(att_sc[...], wih_ref[...],
                         preferred_element_type=jnp.float32) + b_ref[...]  # (N, 4H)
    h = jnp.zeros((B, H), jnp.float32)
    c = jnp.zeros((B, H), jnp.float32)
    for t in range(T):
        gates = xg_sc[t * B:(t + 1) * B, :] + jnp.dot(
            h, whh_ref[...], preferred_element_type=jnp.float32)
        h, c = _lstm_cell(gates, c)

    # ---- fused output Linear(128 -> 64) ----
    out_ref[...] = jnp.dot(h, wo_ref[...],
                           preferred_element_type=jnp.float32) + bo_ref[...]


def ehe_forward(feat, si, mk, T, B, p):
    return pl.pallas_call(
        functools.partial(_ehe_kernel, T=T, B=B),
        out_shape=jax.ShapeDtypeStruct((B, ATT), jnp.float32),
        in_specs=_vmem_specs(15),
        out_specs=pl.BlockSpec(memory_space=pltpu.MemorySpace.VMEM),
        scratch_shapes=[
            pltpu.VMEM((T * B * 9, ATT), jnp.float32),   # q
            pltpu.VMEM((T * B * 9, ATT), jnp.float32),   # v
            pltpu.VMEM((T * B, ATT), jnp.float32),       # k
            pltpu.VMEM((T * B, ATT), jnp.float32),       # attended (LSTM inputs, time-major)
            pltpu.VMEM((T * B, 4 * H), jnp.float32),     # batched LSTM input projection
        ],
    )(feat, si, mk,
      p['ehe_fus_w'], p['ehe_fus_b'], p['ehe_k_w'], p['ehe_q_w'], p['ehe_v_w'],
      p['sel'], p['selT'],
      p['ehe_wih'], p['ehe_whh'], p['ehe_b'], p['ehe_out_w'], p['ehe_out_b'])


# ----------------------------------------------------------------------------
# Kernel 3: fused NodeFutureEncoder:
#   initial_h / initial_c linears + forward LSTM + backward single-step
#   + output Linear(256 -> 64), all in one kernel.
# ----------------------------------------------------------------------------
def _nfe_kernel(fut_ref, curr_ref, wh_ref, bh_ref, wc_ref, bc_ref,
                wfi_ref, wfh_ref, bf_ref, wbi_ref, wbh_ref, bb_ref,
                wo_ref, bo_ref, out_ref, xg_sc, *, T, B):
    curr = curr_ref[...]                                                   # (B, 6)
    h0 = jnp.dot(curr, wh_ref[...], preferred_element_type=jnp.float32) + bh_ref[...]
    c0 = jnp.dot(curr, wc_ref[...], preferred_element_type=jnp.float32) + bc_ref[...]

    # forward direction over the future sequence
    xg_sc[...] = jnp.dot(fut_ref[...], wfi_ref[...],
                         preferred_element_type=jnp.float32) + bf_ref[...]
    h, c = h0, c0
    for t in range(T):
        gates = xg_sc[t * B:(t + 1) * B, :] + jnp.dot(
            h, wfh_ref[...], preferred_element_type=jnp.float32)
        h, c = _lstm_cell(gates, c)
    h_fwd = h

    # backward direction's contribution to hiddens[-1]: one cell step on the last
    # future state starting from (h0, c0).
    x_last = fut_ref[(T - 1) * B:T * B, :]
    gates_b = (jnp.dot(x_last, wbi_ref[...], preferred_element_type=jnp.float32)
               + jnp.dot(h0, wbh_ref[...], preferred_element_type=jnp.float32)
               + bb_ref[...])
    h_bwd, _ = _lstm_cell(gates_b, c0)

    # fused output Linear on [h_fwd, h_bwd] without materializing the concat
    out_ref[...] = (jnp.dot(h_fwd, wo_ref[0:H, :], preferred_element_type=jnp.float32)
                    + jnp.dot(h_bwd, wo_ref[H:2 * H, :], preferred_element_type=jnp.float32)
                    + bo_ref[...])


def nfe_forward(fut2d, curr, T, B, p):
    return pl.pallas_call(
        functools.partial(_nfe_kernel, T=T, B=B),
        out_shape=jax.ShapeDtypeStruct((B, ATT), jnp.float32),
        in_specs=_vmem_specs(14),
        out_specs=pl.BlockSpec(memory_space=pltpu.MemorySpace.VMEM),
        scratch_shapes=[pltpu.VMEM((T * B, 4 * H), jnp.float32)],
    )(fut2d, curr,
      p['nfe_h_w'], p['nfe_h_b'], p['nfe_c_w'], p['nfe_c_b'],
      p['nfe_f_wih'], p['nfe_f_whh'], p['nfe_f_b'],
      p['nfe_b_wih'], p['nfe_b_whh'], p['nfe_b_b'],
      p['nfe_out_w'], p['nfe_out_b'])


# ----------------------------------------------------------------------------
# Parameters (deterministic synthetic init)
# ----------------------------------------------------------------------------
def init_params(key):
    keys = iter(jax.random.split(key, 32))

    def w(shape, scale=0.1):
        return scale * jax.random.normal(next(keys), shape, dtype=jnp.float32)

    p = {}
    # NodeHistoryEncoder LSTM(6 -> 128)
    p['nhe_wih'] = w((6, 4 * H)); p['nhe_whh'] = w((H, 4 * H)); p['nhe_b'] = w((1, 4 * H))
    # MaskedEdgeHistoryEncoder
    p['ehe_fus_w'] = w((FEAT, ATT)); p['ehe_fus_b'] = w((1, ATT))
    p['ehe_k_w'] = w((6, ATT))                      # no bias
    p['ehe_q_w'] = w((ATT, ATT))                    # no bias
    p['ehe_v_w'] = w((ATT, ATT))                    # no bias
    p['ehe_wih'] = w((ATT, 4 * H)); p['ehe_whh'] = w((H, 4 * H)); p['ehe_b'] = w((1, 4 * H))
    p['ehe_out_w'] = w((H, ATT)); p['ehe_out_b'] = w((1, ATT))
    # NodeFutureEncoder (bidirectional LSTM(6 -> 128))
    p['nfe_h_w'] = w((6, H)); p['nfe_h_b'] = w((1, H))
    p['nfe_c_w'] = w((6, H)); p['nfe_c_b'] = w((1, H))
    p['nfe_f_wih'] = w((6, 4 * H)); p['nfe_f_whh'] = w((H, 4 * H)); p['nfe_f_b'] = w((1, 4 * H))
    p['nfe_b_wih'] = w((6, 4 * H)); p['nfe_b_whh'] = w((H, 4 * H)); p['nfe_b_b'] = w((1, 4 * H))
    p['nfe_out_w'] = w((2 * H, ATT)); p['nfe_out_b'] = w((1, ATT))
    # head-selector matrices (constant): lane a belongs to head a // HEAD
    sel = np.zeros((ATT, N_HEADS), np.float32)
    sel[np.arange(ATT), np.arange(ATT) // HEAD] = 1.0
    p['sel'] = jnp.asarray(sel)
    p['selT'] = jnp.asarray(sel.T)
    return p


# ----------------------------------------------------------------------------
# Encoder forward (thin JAX glue; all hot paths are the three fused kernels)
# ----------------------------------------------------------------------------
def encoder_forward(params, input_seqs, input_masks, input_edge_types,
                    pred_seqs=None, mode='predict'):
    p = params
    bs, seq = input_seqs.shape[:2]

    # --- NodeHistoryEncoder ---
    self_hist = input_seqs[:, :, 1, 1, :]                                  # (bs, seq, 6)
    nh_x = jnp.transpose(self_hist, (1, 0, 2)).reshape(seq * bs, 6)        # time-major flat
    nhe = nhe_forward(nh_x, seq, bs, p)                                    # (bs, 128)

    # --- MaskedEdgeHistoryEncoder ---
    loc = jnp.broadcast_to(jnp.eye(9, dtype=jnp.float32)[None, None], (bs, seq, 9, 9))
    feat = jnp.concatenate([input_seqs.reshape(bs, seq, 9, 6),
                            input_edge_types.reshape(bs, seq, 9, 4), loc], axis=-1)
    feat = jnp.transpose(feat, (1, 0, 2, 3)).reshape(seq * bs * 9, FEAT)   # (seq*bs*9, 19)
    si = nh_x                                                              # (seq*bs, 6)
    mk = jnp.transpose(input_masks.reshape(bs, seq, 9), (1, 0, 2))
    mk = mk.reshape(seq * bs * 9, 1).astype(jnp.float32)
    ehe = ehe_forward(feat, si, mk, seq, bs, p)                            # (bs, 64)

    x = jnp.concatenate([nhe, ehe], axis=-1)                               # (bs, 192)
    if mode == 'predict':
        return x

    # --- NodeFutureEncoder (training / eval path) ---
    assert pred_seqs is not None
    pred_len = pred_seqs.shape[1]
    fut = jnp.transpose(pred_seqs[:, :, 1, 1, :], (1, 0, 2)).reshape(pred_len * bs, 6)
    curr = input_seqs[:, -1, 1, 1, :]                                      # (bs, 6)
    # TODO(synk): on v7x the nhe / nfe recurrences could additionally be run on separate
    # TensorCores; kept as separate fused calls here since their T and weights differ.
    y = nfe_forward(fut, curr, pred_len, bs, p)                            # (bs, 64)
    return x, y


# ----------------------------------------------------------------------------
# Pure-JAX reference (mirrors the PyTorch math) for verification
# ----------------------------------------------------------------------------
def ref_forward(params, input_seqs, input_masks, input_edge_types,
                pred_seqs=None, mode='predict'):
    p = params
    bs, seq = input_seqs.shape[:2]

    def lstm_last_ref(x_seq, wih, whh, b, h0, c0):
        def step(carry, x_t):
            h, c = carry
            g = x_t @ wih + h @ whh + b
            i = jax.nn.sigmoid(g[:, :H]); f = jax.nn.sigmoid(g[:, H:2 * H])
            cg = jnp.tanh(g[:, 2 * H:3 * H]); o = jax.nn.sigmoid(g[:, 3 * H:])
            c = f * c + i * cg
            h = o * jnp.tanh(c)
            return (h, c), None
        (h, _), _ = jax.lax.scan(step, (h0, c0), x_seq)
        return h

    z = jnp.zeros((bs, H), jnp.float32)
    nhe = lstm_last_ref(jnp.transpose(input_seqs[:, :, 1, 1, :], (1, 0, 2)),
                        p['nhe_wih'], p['nhe_whh'], p['nhe_b'], z, z)

    loc = jnp.broadcast_to(jnp.eye(9, dtype=jnp.float32).reshape(1, 1, 3, 3, 9),
                           (bs, seq, 3, 3, 9))
    feat = jnp.concatenate([input_seqs, input_edge_types, loc], -1).reshape(bs, seq, 9, FEAT)
    si = jnp.broadcast_to(input_seqs[:, :, 1, 1, :][:, :, None, :], (bs, seq, 9, 6))
    mk = input_masks.reshape(bs, seq, 9)[..., None]
    e = feat @ p['ehe_fus_w'] + p['ehe_fus_b']
    k = si @ p['ehe_k_w']; q = e @ p['ehe_q_w']; v = e @ p['ehe_v_w']
    kh = k.reshape(bs, seq, 9, N_HEADS, HEAD)
    qh = q.reshape(bs, seq, 9, N_HEADS, HEAD)
    vh = v.reshape(bs, seq, 9, N_HEADS, HEAD)
    att = (kh * qh).sum(-1) / math.sqrt(HEAD)
    att = jnp.where(mk > 0.5, att, -1e10)
    att = jax.nn.softmax(att, axis=2)
    attended = (att[..., None] * vh).sum(axis=2).reshape(bs, seq, ATT)
    ehe_h = lstm_last_ref(jnp.transpose(attended, (1, 0, 2)),
                          p['ehe_wih'], p['ehe_whh'], p['ehe_b'], z, z)
    ehe = ehe_h @ p['ehe_out_w'] + p['ehe_out_b']
    x = jnp.concatenate([nhe, ehe], axis=-1)
    if mode == 'predict':
        return x

    futures = jnp.transpose(pred_seqs[:, :, 1, 1, :], (1, 0, 2))
    curr = input_seqs[:, -1, 1, 1, :]
    h0 = curr @ p['nfe_h_w'] + p['nfe_h_b']
    c0 = curr @ p['nfe_c_w'] + p['nfe_c_b']
    h_fwd = lstm_last_ref(futures, p['nfe_f_wih'], p['nfe_f_whh'], p['nfe_f_b'], h0, c0)
    h_bwd = lstm_last_ref(futures[-1:], p['nfe_b_wih'], p['nfe_b_whh'], p['nfe_b_b'], h0, c0)
    y = jnp.concatenate([h_fwd, h_bwd], axis=-1) @ p['nfe_out_w'] + p['nfe_out_b']
    return x, y


if __name__ == "__main__":
    key = jax.random.PRNGKey(0)
    kp, k1, k2, k3, k4 = jax.random.split(key, 5)
    params = init_params(kp)

    bs, seq, pred_len = 2, 8, 6
    input_seqs = jax.random.normal(k1, (bs, seq, 3, 3, 6), dtype=jnp.float32)
    input_edge_types = jax.random.normal(k2, (bs, seq, 3, 3, 4), dtype=jnp.float32)
    input_masks = (jax.random.uniform(k3, (bs, seq, 3, 3)) > 0.3).astype(jnp.float32)
    pred_seqs = jax.random.normal(k4, (bs, pred_len, 3, 3, 6), dtype=jnp.float32)

    # predict mode: x only
    x = encoder_forward(params, input_seqs, input_masks, input_edge_types, mode='predict')
    x = jax.block_until_ready(x)
    x_ref = ref_forward(params, input_seqs, input_masks, input_edge_types, mode='predict')
    np.testing.assert_allclose(np.asarray(x), np.asarray(x_ref), rtol=5e-2, atol=1e-2)
    assert x.shape == (bs, H + ATT)

    # training mode: (x, y)
    x2, y2 = encoder_forward(params, input_seqs, input_masks, input_edge_types,
                             pred_seqs=pred_seqs, mode='training')
    jax.block_until_ready((x2, y2))
    x2_ref, y2_ref = ref_forward(params, input_seqs, input_masks, input_edge_types,
                                 pred_seqs=pred_seqs, mode='training')
    np.testing.assert_allclose(np.asarray(x2), np.asarray(x2_ref), rtol=5e-2, atol=1e-2)
    np.testing.assert_allclose(np.asarray(y2), np.asarray(y2_ref), rtol=5e-2, atol=1e-2)
    assert y2.shape == (bs, ATT)

    print("KERNEL_OK")
</pallas_src>

<mosaic_0001>
module attributes {stable_mosaic.version = 11 : i64} {
  func.func @_nhe_kernel(%arg0: memref<16x6xf32, #tpu.memory_space<vmem>>, %arg1: memref<6x512xf32, #tpu.memory_space<vmem>>, %arg2: memref<128x512xf32, #tpu.memory_space<vmem>>, %arg3: memref<1x512xf32, #tpu.memory_space<vmem>>, %arg4: memref<2x128xf32, #tpu.memory_space<vmem>>, %arg5: memref<16x512xf32, #tpu.memory_space<vmem>>) attributes {dimension_semantics = [], scalar_prefetch = 0 : i64, scratch_operands = 1 : i64, tpu.core_type = #tpu.core_type<tc>} {
    %c0 = arith.constant 0 : index
    %c0_0 = arith.constant 0 : index
    %0 = vector.load %arg0[%c0, %c0_0] : memref<16x6xf32, #tpu.memory_space<vmem>>, vector<16x6xf32>
    %c0_1 = arith.constant 0 : index
    %c0_2 = arith.constant 0 : index
    %1 = vector.load %arg1[%c0_1, %c0_2] : memref<6x512xf32, #tpu.memory_space<vmem>>, vector<6x512xf32>
    %cst = arith.constant dense<0.000000e+00> : vector<16x512xf32>
    %2 = tpu.matmul %0, %1, %cst {dimension_numbers = #tpu.dot_dimension_numbers<[1], [0], [0], [1], [0, 0, 1, 1], [], []>} : vector<16x6xf32>, vector<6x512xf32>, vector<16x512xf32> -> vector<16x512xf32>
    %c0_3 = arith.constant 0 : index
    %c0_4 = arith.constant 0 : index
    %3 = vector.load %arg3[%c0_3, %c0_4] : memref<1x512xf32, #tpu.memory_space<vmem>>, vector<1x512xf32>
    %4 = vector.broadcast %3 : vector<1x512xf32> to vector<16x512xf32>
    %5 = arith.addf %2, %4 : vector<16x512xf32>
    %c0_5 = arith.constant 0 : index
    %c0_6 = arith.constant 0 : index
    %6 = vector.load %arg5[%c0_5, %c0_6] : memref<16x512xf32, #tpu.memory_space<vmem>>, vector<16x512xf32>
    tpu.vector_store %arg5[%c0_5, %c0_6], %5 {strides = array<i32>} : memref<16x512xf32, #tpu.memory_space<vmem>>, vector<16x512xf32>,
    %cst_7 = arith.constant 0.000000e+00 : f32
    %7 = vector.broadcast %cst_7 : f32 to vector<2x128xf32>
    %cst_8 = arith.constant 0.000000e+00 : f32
    %8 = vector.broadcast %cst_8 : f32 to vector<2x128xf32>
    %c0_9 = arith.constant 0 : index
    %c0_10 = arith.constant 0 : index
    %9 = vector.load %arg5[%c0_9, %c0_10] : memref<16x512xf32, #tpu.memory_space<vmem>>, vector<2x512xf32>
    %c0_11 = arith.constant 0 : index
    %c0_12 = arith.constant 0 : index
    %10 = vector.load %arg2[%c0_11, %c0_12] : memref<128x512xf32, #tpu.memory_space<vmem>>, vector<128x512xf32>
    %cst_13 = arith.constant dense<0.000000e+00> : vector<2x512xf32>
    %11 = tpu.matmul %7, %10, %cst_13 {dimension_numbers = #tpu.dot_dimension_numbers<[1], [0], [0], [1], [0, 0, 1, 1], [], []>} : vector<2x128xf32>, vector<128x512xf32>, vector<2x512xf32> -> vector<2x512xf32>
    %12 = arith.addf %9, %11 : vector<2x512xf32>
    %13 = vector.extract_strided_slice %12 {offsets = [0, 0], sizes = [2, 128], strides = [1, 1]} : vector<2x512xf32> to vector<2x128xf32>
    %14 = arith.negf %13 : vector<2x128xf32>
    %15 = math.exp %14 : vector<2x128xf32>
    %cst_14 = arith.constant 1.000000e+00 : f32
    %16 = vector.broadcast %cst_14 : f32 to vector<2x128xf32>
    %17 = arith.addf %16, %15 : vector<2x128xf32>
    %18 = arith.divf %16, %17 : vector<2x128xf32>
    %19 = vector.extract_strided_slice %12 {offsets = [0, 128], sizes = [2, 128], strides = [1, 1]} : vector<2x512xf32> to vector<2x128xf32>
    %20 = arith.negf %19 : vector<2x128xf32>
    %21 = math.exp %20 : vector<2x128xf32>
    %cst_15 = arith.constant 1.000000e+00 : f32
    %22 = vector.broadcast %cst_15 : f32 to vector<2x128xf32>
    %23 = arith.addf %22, %21 : vector<2x128xf32>
    %24 = arith.divf %22, %23 : vector<2x128xf32>
    %25 = vector.extract_strided_slice %12 {offsets = [0, 256], sizes = [2, 128], strides = [1, 1]} : vector<2x512xf32> to vector<2x128xf32>
    %26 = math.tanh %25 : vector<2x128xf32>
    %27 = vector.extract_strided_slice %12 {offsets = [0, 384], sizes = [2, 128], strides = [1, 1]} : vector<2x512xf32> to vector<2x128xf32>
    %28 = arith.negf %27 : vector<2x128xf32>
    %29 = math.exp %28 : vector<2x128xf32>
    %cst_16 = arith.constant 1.000000e+00 : f32
    %30 = vector.broadcast %cst_16 : f32 to vector<2x128xf32>
    %31 = arith.addf %30, %29 : vector<2x128xf32>
    %32 = arith.divf %30, %31 : vector<2x128xf32>
    %33 = arith.mulf %24, %8 : vector<2x128xf32>
    %34 = arith.mulf %18, %26 : vector<2x128xf32>
    %35 = arith.addf %33, %34 : vector<2x128xf32>
    %36 = math.tanh %35 : vector<2x128xf32>
    %37 = arith.mulf %32, %36 : vector<2x128xf32>
    %c2 = arith.constant 2 : index
    %c0_17 = arith.constant 0 : index
    %38 = vector.load %arg5[%c2, %c0_17] : memref<16x512xf32, #tpu.memory_space<vmem>>, vector<2x512xf32>
    %c0_18 = arith.constant 0 : index
    %c0_19 = arith.constant 0 : index
    %39 = vector.load %arg2[%c0_18, %c0_19] : memref<128x512xf32, #tpu.memory_space<vmem>>, vector<128x512xf32>
    %cst_20 = arith.constant dense<0.000000e+00> : vector<2x512xf32>
    %40 = tpu.matmul %37, %39, %cst_20 {dimension_numbers = #tpu.dot_dimension_numbers<[1], [0], [0], [1], [0, 0, 1, 1], [], []>} : vector<2x128xf32>, vector<128x512xf32>, vector<2x512xf32> -> vector<2x512xf32>
    %41 = arith.addf %38, %40 : vector<2x512xf32>
    %42 = vector.extract_strided_slice %41 {offsets = [0, 0], sizes = [2, 128], strides = [1, 1]} : vector<2x512xf32> to vector<2x128xf32>
    %43 = arith.negf %42 : vector<2x128xf32>
    %44 = math.exp %43 : vector<2x128xf32>
    %cst_21 = arith.constant 1.000000e+00 : f32
    %45 = vector.broadcast %cst_21 : f32 to vector<2x128xf32>
    %46 = arith.addf %45, %44 : vector<2x128xf32>
    %47 = arith.divf %45, %46 : vector<2x128xf32>
    %48 = vector.extract_strided_slice %41 {offsets = [0, 128], sizes = [2, 128], strides = [1, 1]} : vector<2x512xf32> to vector<2x128xf32>
    %49 = arith.negf %48 : vector<2x128xf32>
    %50 = math.exp %49 : vector<2x128xf32>
    %cst_22 = arith.constant 1.000000e+00 : f32
    %51 = vector.broadcast %cst_22 : f32 to vector<2x128xf32>
    %52 = arith.addf %51, %50 : vector<2x128xf32>
    %53 = arith.divf %51, %52 : vector<2x128xf32>
    %54 = vector.extract_strided_slice %41 {offsets = [0, 256], sizes = [2, 128], strides = [1, 1]} : vector<2x512xf32> to vector<2x128xf32>
    %55 = math.tanh %54 : vector<2x128xf32>
    %56 = vector.extract_strided_slice %41 {offsets = [0, 384], sizes = [2, 128], strides = [1, 1]} : vector<2x512xf32> to vector<2x128xf32>
    %57 = arith.negf %56 : vector<2x128xf32>
    %58 = math.exp %57 : vector<2x128xf32>
    %cst_23 = arith.constant 1.000000e+00 : f32
    %59 = vector.broadcast %cst_23 : f32 to vector<2x128xf32>
    %60 = arith.addf %59, %58 : vector<2x128xf32>
    %61 = arith.divf %59, %60 : vector<2x128xf32>
    %62 = arith.mulf %53, %35 : vector<2x128xf32>
    %63 = arith.mulf %47, %55 : vector<2x128xf32>
    %64 = arith.addf %62, %63 : vector<2x128xf32>
    %65 = math.tanh %64 : vector<2x128xf32>
    %66 = arith.mulf %61, %65 : vector<2x128xf32>
    %c4 = arith.constant 4 : index
    %c0_24 = arith.constant 0 : index
    %67 = vector.load %arg5[%c4, %c0_24] : memref<16x512xf32, #tpu.memory_space<vmem>>, vector<2x512xf32>
    %c0_25 = arith.constant 0 : index
    %c0_26 = arith.constant 0 : index
    %68 = vector.load %arg2[%c0_25, %c0_26] : memref<128x512xf32, #tpu.memory_space<vmem>>, vector<128x512xf32>
    %cst_27 = arith.constant dense<0.000000e+00> : vector<2x512xf32>
    %69 = tpu.matmul %66, %68, %cst_27 {dimension_numbers = #tpu.dot_dimension_numbers<[1], [0], [0], [1], [0, 0, 1, 1], [], []>} : vector<2x128xf32>, vector<128x512xf32>, vector<2x512xf32> -> vector<2x512xf32>
    %70 = arith.addf %67, %69 : vector<2x512xf32>
    %71 = vector.extract_strided_slice %70 {offsets = [0, 0], sizes = [2, 128], strides = [1, 1]} : vector<2x512xf32> to vector<2x128xf32>
    %72 = arith.negf %71 : vector<2x128xf32>
    %73 = math.exp %72 : vector<2x128xf32>
    %cst_28 = arith.constant 1.000000e+00 : f32
    %74 = vector.broadcast %cst_28 : f32 to vector<2x128xf32>
    %75 = arith.addf %74, %73 : vector<2x128xf32>
    %76 = arith.divf %74, %75 : vector<2x128xf32>
    %77 = vector.extract_strided_slice %70 {offsets = [0, 128], sizes = [2, 128], strides = [1, 1]} : vector<2x512xf32> to vector<2x128xf32>
    %78 = arith.negf %77 : vector<2x128xf32>
    %79 = math.exp %78 : vector<2x128xf32>
    %cst_29 = arith.constant 1.000000e+00 : f32
    %80 = vector.broadcast %cst_29 : f32 to vector<2x128xf32>
    %81 = arith.addf %80, %79 : vector<2x128xf32>
    %82 = arith.divf %80, %81 : vector<2x128xf32>
    %83 = vector.extract_strided_slice %70 {offsets = [0, 256], sizes = [2, 128], strides = [1, 1]} : vector<2x512xf32> to vector<2x128xf32>
    %84 = math.tanh %83 : vector<2x128xf32>
    %85 = vector.extract_strided_slice %70 {offsets = [0, 384], sizes = [2, 128], strides = [1, 1]} : vector<2x512xf32> to vector<2x128xf32>
    %86 = arith.negf %85 : vector<2x128xf32>
    %87 = math.exp %86 : vector<2x128xf32>
    %cst_30 = arith.constant 1.000000e+00 : f32
    %88 = vector.broadcast %cst_30 : f32 to vector<2x128xf32>
    %89 = arith.addf %88, %87 : vector<2x128xf32>
    %90 = arith.divf %88, %89 : vector<2x128xf32>
    %91 = arith.mulf %82, %64 : vector<2x128xf32>
    %92 = arith.mulf %76, %84 : vector<2x128xf32>
    %93 = arith.addf %91, %92 : vector<2x128xf32>
    %94 = math.tanh %93 : vector<2x128xf32>
    %95 = arith.mulf %90, %94 : vector<2x128xf32>
    %c6 = arith.constant 6 : index
    %c0_31 = arith.constant 0 : index
    %96 = vector.load %arg5[%c6, %c0_31] : memref<16x512xf32, #tpu.memory_space<vmem>>, vector<2x512xf32>
    %c0_32 = arith.constant 0 : index
    %c0_33 = arith.constant 0 : index
    %97 = vector.load %arg2[%c0_32, %c0_33] : memref<128x512xf32, #tpu.memory_space<vmem>>, vector<128x512xf32>
    %cst_34 = arith.constant dense<0.000000e+00> : vector<2x512xf32>
    %98 = tpu.matmul %95, %97, %cst_34 {dimension_numbers = #tpu.dot_dimension_numbers<[1], [0], [0], [1], [0, 0, 1, 1], [], []>} : vector<2x128xf32>, vector<128x512xf32>, vector<2x512xf32> -> vector<2x512xf32>
    %99 = arith.addf %96, %98 : vector<2x512xf32>
    %100 = vector.extract_strided_slice %99 {offsets = [0, 0], sizes = [2, 128], strides = [1, 1]} : vector<2x512xf32> to vector<2x128xf32>
    %101 = arith.negf %100 : vector<2x128xf32>
    %102 = math.exp %101 : vector<2x128xf32>
    %cst_35 = arith.constant 1.000000e+00 : f32
    %103 = vector.broadcast %cst_35 : f32 to vector<2x128xf32>
    %104 = arith.addf %103, %102 : vector<2x128xf32>
    %105 = arith.divf %103, %104 : vector<2x128xf32>
    %106 = vector.extract_strided_slice %99 {offsets = [0, 128], sizes = [2, 128], strides = [1, 1]} : vector<2x512xf32> to vector<2x128xf32>
    %107 = arith.negf %106 : vector<2x128xf32>
    %108 = math.exp %107 : vector<2x128xf32>
    %cst_36 = arith.constant 1.000000e+00 : f32
    %109 = vector.broadcast %cst_36 : f32 to vector<2x128xf32>
    %110 = arith.addf %109, %108 : vector<2x128xf32>
    %111 = arith.divf %109, %110 : vector<2x128xf32>
    %112 = vector.extract_strided_slice %99 {offsets = [0, 256], sizes = [2, 128], strides = [1, 1]} : vector<2x512xf32> to vector<2x128xf32>
    %113 = math.tanh %112 : vector<2x128xf32>
    %114 = vector.extract_strided_slice %99 {offsets = [0, 384], sizes = [2, 128], strides = [1, 1]} : vector<2x512xf32> to vector<2x128xf32>
    %115 = arith.negf %114 : vector<2x128xf32>
    %116 = math.exp %115 : vector<2x128xf32>
    %cst_37 = arith.constant 1.000000e+00 : f32
    %117 = vector.broadcast %cst_37 : f32 to vector<2x128xf32>
    %118 = arith.addf %117, %116 : vector<2x128xf32>
    %119 = arith.divf %117, %118 : vector<2x128xf32>
    %120 = arith.mulf %111, %93 : vector<2x128xf32>
    %121 = arith.mulf %105, %113 : vector<2x128xf32>
    %122 = arith.addf %120, %121 : vector<2x128xf32>
    %123 = math.tanh %122 : vector<2x128xf32>
    %124 = arith.mulf %119, %123 : vector<2x128xf32>
    %c8 = arith.constant 8 : index
    %c0_38 = arith.constant 0 : index
    %125 = vector.load %arg5[%c8, %c0_38] : memref<16x512xf32, #tpu.memory_space<vmem>>, vector<2x512xf32>
    %c0_39 = arith.constant 0 : index
    %c0_40 = arith.constant 0 : index
    %126 = vector.load %arg2[%c0_39, %c0_40] : memref<128x512xf32, #tpu.memory_space<vmem>>, vector<128x512xf32>
    %cst_41 = arith.constant dense<0.000000e+00> : vector<2x512xf32>
    %127 = tpu.matmul %124, %126, %cst_41 {dimension_numbers = #tpu.dot_dimension_numbers<[1], [0], [0], [1], [0, 0, 1, 1], [], []>} : vector<2x128xf32>, vector<128x512xf32>, vector<2x512xf32> -> vector<2x512xf32>
    %128 = arith.addf %125, %127 : vector<2x512xf32>
    %129 = vector.extract_strided_slice %128 {offsets = [0, 0], sizes = [2, 128], strides = [1, 1]} : vector<2x512xf32> to vector<2x128xf32>
    %130 = arith.negf %129 : vector<2x128xf32>
    %131 = math.exp %130 : vector<2x128xf32>
    %cst_42 = arith.constant 1.000000e+00 : f32
    %132 = vector.broadcast %cst_42 : f32 to vector<2x128xf32>
    %133 = arith.addf %132, %131 : vector<2x128xf32>
    %134 = arith.divf %132, %133 : vector<2x128xf32>
    %135 = vector.extract_strided_slice %128 {offsets = [0, 128], sizes = [2, 128], strides = [1, 1]} : vector<2x512xf32> to vector<2x128xf32>
    %136 = arith.negf %135 : vector<2x128xf32>
    %137 = math.exp %136 : vector<2x128xf32>
    %cst_43 = arith.constant 1.000000e+00 : f32
    %138 = vector.broadcast %cst_43 : f32 to vector<2x128xf32>
    %139 = arith.addf %138, %137 : vector<2x128xf32>
    %140 = arith.divf %138, %139 : vector<2x128xf32>
    %141 = vector.extract_strided_slice %128 {offsets = [0, 256], sizes = [2, 128], strides = [1, 1]} : vector<2x512xf32> to vector<2x128xf32>
    %142 = math.tanh %141 : vector<2x128xf32>
    %143 = vector.extract_strided_slice %128 {offsets = [0, 384], sizes = [2, 128], strides = [1, 1]} : vector<2x512xf32> to vector<2x128xf32>
    %144 = arith.negf %143 : vector<2x128xf32>
    %145 = math.exp %144 : vector<2x128xf32>
    %cst_44 = arith.constant 1.000000e+00 : f32
    %146 = vector.broadcast %cst_44 : f32 to vector<2x128xf32>
    %147 = arith.addf %146, %145 : vector<2x128xf32>
    %148 = arith.divf %146, %147 : vector<2x128xf32>
    %149 = arith.mulf %140, %122 : vector<2x128xf32>
    %150 = arith.mulf %134, %142 : vector<2x128xf32>
    %151 = arith.addf %149, %150 : vector<2x128xf32>
    %152 = math.tanh %151 : vector<2x128xf32>
    %153 = arith.mulf %148, %152 : vector<2x128xf32>
    %c10 = arith.constant 10 : index
    %c0_45 = arith.constant 0 : index
    %154 = vector.load %arg5[%c10, %c0_45] : memref<16x512xf32, #tpu.memory_space<vmem>>, vector<2x512xf32>
    %c0_46 = arith.constant 0 : index
    %c0_47 = arith.constant 0 : index
    %155 = vector.load %arg2[%c0_46, %c0_47] : memref<128x512xf32, #tpu.memory_space<vmem>>, vector<128x512xf32>
    %cst_48 = arith.constant dense<0.000000e+00> : vector<2x512xf32>
    %156 = tpu.matmul %153, %155, %cst_48 {dimension_numbers = #tpu.dot_dimension_numbers<[1], [0], [0], [1], [0, 0, 1, 1], [], []>} : vector<2x128xf32>, vector<128x512xf32>, vector<2x512xf32> -> vector<2x512xf32>
    %157 = arith.addf %154, %156 : vector<2x512xf32>
    %158 = vector.extract_strided_slice %157 {offsets = [0, 0], sizes = [2, 128], strides = [1, 1]} : vector<2x512xf32> to vector<2x128xf32>
    %159 = arith.negf %158 : vector<2x128xf32>
    %160 = math.exp %159 : vector<2x128xf32>
    %cst_49 = arith.constant 1.000000e+00 : f32
    %161 = vector.broadcast %cst_49 : f32 to vector<2x128xf32>
    %162 = arith.addf %161, %160 : vector<2x128xf32>
    %163 = arith.divf %161, %162 : vector<2x128xf32>
    %164 = vector.extract_strided_slice %157 {offsets = [0, 128], sizes = [2, 128], strides = [1, 1]} : vector<2x512xf32> to vector<2x128xf32>
    %165 = arith.negf %164 : vector<2x128xf32>
    %166 = math.exp %165 : vector<2x128xf32>
    %cst_50 = arith.constant 1.000000e+00 : f32
    %167 = vector.broadcast %cst_50 : f32 to vector<2x128xf32>
    %168 = arith.addf %167, %166 : vector<2x128xf32>
    %169 = arith.divf %167, %168 : vector<2x128xf32>
    %170 = vector.extract_strided_slice %157 {offsets = [0, 256], sizes = [2, 128], strides = [1, 1]} : vector<2x512xf32> to vector<2x128xf32>
    %171 = math.tanh %170 : vector<2x128xf32>
    %172 = vector.extract_strided_slice %157 {offsets = [0, 384], sizes = [2, 128], strides = [1, 1]} : vector<2x512xf32> to vector<2x128xf32>
    %173 = arith.negf %172 : vector<2x128xf32>
    %174 = math.exp %173 : vector<2x128xf32>
    %cst_51 = arith.constant 1.000000e+00 : f32
    %175 = vector.broadcast %cst_51 : f32 to vector<2x128xf32>
    %176 = arith.addf %175, %174 : vector<2x128xf32>
    %177 = arith.divf %175, %176 : vector<2x128xf32>
    %178 = arith.mulf %169, %151 : vector<2x128xf32>
    %179 = arith.mulf %163, %171 : vector<2x128xf32>
    %180 = arith.addf %178, %179 : vector<2x128xf32>
    %181 = math.tanh %180 : vector<2x128xf32>
    %182 = arith.mulf %177, %181 : vector<2x128xf32>
    %c12 = arith.constant 12 : index
    %c0_52 = arith.constant 0 : index
    %183 = vector.load %arg5[%c12, %c0_52] : memref<16x512xf32, #tpu.memory_space<vmem>>, vector<2x512xf32>
    %c0_53 = arith.constant 0 : index
    %c0_54 = arith.constant 0 : index
    %184 = vector.load %arg2[%c0_53, %c0_54] : memref<128x512xf32, #tpu.memory_space<vmem>>, vector<128x512xf32>
    %cst_55 = arith.constant dense<0.000000e+00> : vector<2x512xf32>
    %185 = tpu.matmul %182, %184, %cst_55 {dimension_numbers = #tpu.dot_dimension_numbers<[1], [0], [0], [1], [0, 0, 1, 1], [], []>} : vector<2x128xf32>, vector<128x512xf32>, vector<2x512xf32> -> vector<2x512xf32>
    %186 = arith.addf %183, %185 : vector<2x512xf32>
    %187 = vector.extract_strided_slice %186 {offsets = [0, 0], sizes = [2, 128], strides = [1, 1]} : vector<2x512xf32> to vector<2x128xf32>
    %188 = arith.negf %187 : vector<2x128xf32>
    %189 = math.exp %188 : vector<2x128xf32>
    %cst_56 = arith.constant 1.000000e+00 : f32
    %190 = vector.broadcast %cst_56 : f32 to vector<2x128xf32>
    %191 = arith.addf %190, %189 : vector<2x128xf32>
    %192 = arith.divf %190, %191 : vector<2x128xf32>
    %193 = vector.extract_strided_slice %186 {offsets = [0, 128], sizes = [2, 128], strides = [1, 1]} : vector<2x512xf32> to vector<2x128xf32>
    %194 = arith.negf %193 : vector<2x128xf32>
    %195 = math.exp %194 : vector<2x128xf32>
    %cst_57 = arith.constant 1.000000e+00 : f32
    %196 = vector.broadcast %cst_57 : f32 to vector<2x128xf32>
    %197 = arith.addf %196, %195 : vector<2x128xf32>
    %198 = arith.divf %196, %197 : vector<2x128xf32>
    %199 = vector.extract_strided_slice %186 {offsets = [0, 256], sizes = [2, 128], strides = [1, 1]} : vector<2x512xf32> to vector<2x128xf32>
    %200 = math.tanh %199 : vector<2x128xf32>
    %201 = vector.extract_strided_slice %186 {offsets = [0, 384], sizes = [2, 128], strides = [1, 1]} : vector<2x512xf32> to vector<2x128xf32>
    %202 = arith.negf %201 : vector<2x128xf32>
    %203 = math.exp %202 : vector<2x128xf32>
    %cst_58 = arith.constant 1.000000e+00 : f32
    %204 = vector.broadcast %cst_58 : f32 to vector<2x128xf32>
    %205 = arith.addf %204, %203 : vector<2x128xf32>
    %206 = arith.divf %204, %205 : vector<2x128xf32>
    %207 = arith.mulf %198, %180 : vector<2x128xf32>
    %208 = arith.mulf %192, %200 : vector<2x128xf32>
    %209 = arith.addf %207, %208 : vector<2x128xf32>
    %210 = math.tanh %209 : vector<2x128xf32>
    %211 = arith.mulf %206, %210 : vector<2x128xf32>
    %c14 = arith.constant 14 : index
    %c0_59 = arith.constant 0 : index
    %212 = vector.load %arg5[%c14, %c0_59] : memref<16x512xf32, #tpu.memory_space<vmem>>, vector<2x512xf32>
    %c0_60 = arith.constant 0 : index
    %c0_61 = arith.constant 0 : index
    %213 = vector.load %arg2[%c0_60, %c0_61] : memref<128x512xf32, #tpu.memory_space<vmem>>, vector<128x512xf32>
    %cst_62 = arith.constant dense<0.000000e+00> : vector<2x512xf32>
    %214 = tpu.matmul %211, %213, %cst_62 {dimension_numbers = #tpu.dot_dimension_numbers<[1], [0], [0], [1], [0, 0, 1, 1], [], []>} : vector<2x128xf32>, vector<128x512xf32>, vector<2x512xf32> -> vector<2x512xf32>
    %215 = arith.addf %212, %214 : vector<2x512xf32>
    %216 = vector.extract_strided_slice %215 {offsets = [0, 0], sizes = [2, 128], strides = [1, 1]} : vector<2x512xf32> to vector<2x128xf32>
    %217 = arith.negf %216 : vector<2x128xf32>
    %218 = math.exp %217 : vector<2x128xf32>
    %cst_63 = arith.constant 1.000000e+00 : f32
    %219 = vector.broadcast %cst_63 : f32 to vector<2x128xf32>
    %220 = arith.addf %219, %218 : vector<2x128xf32>
    %221 = arith.divf %219, %220 : vector<2x128xf32>
    %222 = vector.extract_strided_slice %215 {offsets = [0, 128], sizes = [2, 128], strides = [1, 1]} : vector<2x512xf32> to vector<2x128xf32>
    %223 = arith.negf %222 : vector<2x128xf32>
    %224 = math.exp %223 : vector<2x128xf32>
    %cst_64 = arith.constant 1.000000e+00 : f32
    %225 = vector.broadcast %cst_64 : f32 to vector<2x128xf32>
    %226 = arith.addf %225, %224 : vector<2x128xf32>
    %227 = arith.divf %225, %226 : vector<2x128xf32>
    %228 = vector.extract_strided_slice %215 {offsets = [0, 256], sizes = [2, 128], strides = [1, 1]} : vector<2x512xf32> to vector<2x128xf32>
    %229 = math.tanh %228 : vector<2x128xf32>
    %230 = vector.extract_strided_slice %215 {offsets = [0, 384], sizes = [2, 128], strides = [1, 1]} : vector<2x512xf32> to vector<2x128xf32>
    %231 = arith.negf %230 : vector<2x128xf32>
    %232 = math.exp %231 : vector<2x128xf32>
    %cst_65 = arith.constant 1.000000e+00 : f32
    %233 = vector.broadcast %cst_65 : f32 to vector<2x128xf32>
    %234 = arith.addf %233, %232 : vector<2x128xf32>
    %235 = arith.divf %233, %234 : vector<2x128xf32>
    %236 = arith.mulf %227, %209 : vector<2x128xf32>
    %237 = arith.mulf %221, %229 : vector<2x128xf32>
    %238 = arith.addf %236, %237 : vector<2x128xf32>
    %239 = math.tanh %238 : vector<2x128xf32>
    %240 = arith.mulf %235, %239 : vector<2x128xf32>
    %c0_66 = arith.constant 0 : index
    %c0_67 = arith.constant 0 : index
    %241 = vector.load %arg4[%c0_66, %c0_67] : memref<2x128xf32, #tpu.memory_space<vmem>>, vector<2x128xf32>
    tpu.vector_store %arg4[%c0_66, %c0_67], %240 {strides = array<i32>} : memref<2x128xf32, #tpu.memory_space<vmem>>, vector<2x128xf32>,
    return
  }
}

</mosaic_0001>

<llo_original>
// kernel: tpu_custom_call.1
$region0: #{tpu_custom_call.1}
  #allocation0 [shape = 'u32[]', space=smem, size = 0x4, offset = 0x4, fixed_abs, tag = 'smem constant byte address 0x4 - core index']
  #allocation1 [shape = 'u32[72,128]{1,0:T(1,128)}', space=vmem, size = 0x9000, scoped, tag = 'internal scratch']
  #allocation2 [shape = 'f32[16,512]{1,0:T(8,128)}', space=vmem, size = 0x8000, scoped, tag = 'scratch operand']
  %s0 = inlined_call_operand.vmem [shape: f32[16,6], index: 0, kind: input, shape index: {}]
  %s1 = inlined_call_operand.hbm [shape: f32[6,512], index: 1, kind: input, shape index: {}]
  %s2 = inlined_call_operand.hbm [shape: f32[128,512], index: 2, kind: input, shape index: {}]
  %s3 = inlined_call_operand.vmem [shape: f32[1,512], index: 3, kind: input, shape index: {}]
  %s4 = inlined_call_operand.hbm [shape: f32[2,128], index: 4, kind: output, shape index: {}]
  %s5 = sld [smem:[#allocation0]]
  $region34: #{tpu_custom_call.1} parent=0
    _
  %s7 = ssub.s32 1, %s5
  %s8 = scalar_select 0, %s7, %s5
  $region1: #{tpu_custom_call.1} parent=0
    #allocation3 [shape = 'u8[16384]{0}', space=vmem, size = 0x4000, scoped, tag = 'input window, operand 1, single buffered']
    #allocation4 [shape = 's32[1]{0}', space=sflag, size = 0x4, scoped, tag = 'scoped memory for tpu_custom_call.1']
    #allocation5 [shape = 's32[1]{0}', space=sflag, size = 0x4, scoped, tag = 'scoped memory for tpu_custom_call.1']
    #allocation6 [shape = 'u8[262144]{0}', space=vmem, size = 0x40000, scoped, tag = 'input window, operand 2, single buffered']
    #allocation7 [shape = 's32[1]{0}', space=sflag, size = 0x4, scoped, tag = 'scoped memory for tpu_custom_call.1']
    #allocation8 [shape = 'u8[1024]{0}', space=vmem, size = 0x400, scoped, tag = 'output window, operand 0, single buffered']
    %9 = vsyncpa [#allocation4], 0
    %10 = vsyncpa [#allocation7], 0
    %11 = vsyncpa [#allocation5], 0
    // Predicated region
    $region2: #{tpu_custom_call.1} parent=1 // pred_check
      _
    $region3: #{tpu_custom_call.1} parent=1 // pred_check_branch
      %13 = sbr.rel (0) target = $region5
    $region4: #{tpu_custom_call.1} parent=1 // pred_region
      _
    $region5: #{tpu_custom_call.1} parent=1 // pred_fallthru
      _
    // Predicated region
    $region6: #{tpu_custom_call.1} parent=1 // pred_check
      _
    $region7: #{tpu_custom_call.1} parent=1 // pred_check_branch
      %15 = sbr.rel (0) target = $region9
    $region8: #{tpu_custom_call.1} parent=1 // pred_region
      %17 = vsyncadd [#allocation4], 0
      %s19 = sshll.u32 %s1, 4
      %s20 = int_to_ptr.hbm [resolvable:$true] %s19
      %s21 = sshll.u32 [#allocation3], 4
      %s22 = int_to_ptr.vmem [resolvable:$true] %s21
      %24 = dma.hbm_to_vmem [thread:$0]  %s20, 512, %s22, [#allocation4]
    $region9: #{tpu_custom_call.1} parent=1 // pred_fallthru
      _
    // Predicated region
    $region10: #{tpu_custom_call.1} parent=1 // pred_check
      _
    $region11: #{tpu_custom_call.1} parent=1 // pred_check_branch
      %26 = sbr.rel (0) target = $region13
    $region12: #{tpu_custom_call.1} parent=1 // pred_region
      %28 = vsyncadd [#allocation7], 0
      %s29 = sshll.u32 %s2, 4
      %s30 = int_to_ptr.hbm [resolvable:$true] %s29
      %s31 = sshll.u32 [#allocation6], 4
      %s32 = int_to_ptr.vmem [resolvable:$true] %s31
      %37 = dma.hbm_to_vmem [thread:$0]  %s30, 8192, %s32, [#allocation7], 512, 512, 32
    $region13: #{tpu_custom_call.1} parent=1 // pred_fallthru
      _
    // Predicated region
    $region14: #{tpu_custom_call.1} parent=1 // pred_check
      _
    $region15: #{tpu_custom_call.1} parent=1 // pred_check_branch
      %39 = sbr.rel (0) target = $region17
    $region16: #{tpu_custom_call.1} parent=1 // pred_region
      _
    $region17: #{tpu_custom_call.1} parent=1 // pred_fallthru
      _
    // Predicated region
    $region18: #{tpu_custom_call.1} parent=1 // pred_check
      _
    $region19: #{tpu_custom_call.1} parent=1 // pred_check_branch
      %41 = sbr.rel (0) target = $region21
    $region20: #{tpu_custom_call.1} parent=1 // pred_region
      %43 = dma.done [#allocation4], 512
    $region21: #{tpu_custom_call.1} parent=1 // pred_fallthru
      _
    // Predicated region
    $region22: #{tpu_custom_call.1} parent=1 // pred_check
      _
    $region23: #{tpu_custom_call.1} parent=1 // pred_check_branch
      %45 = sbr.rel (0) target = $region25
    $region24: #{tpu_custom_call.1} parent=1 // pred_region
      %47 = dma.done [#allocation7], 8192
    $region25: #{tpu_custom_call.1} parent=1 // pred_fallthru
      _
    %v48 = vld [vmem:[%s0] sm:$0xff]
    %v49 = vld [vmem:[%s0 + $0x8] sm:$0xff]
    %v50 = vld [vmem:[#allocation3] sm:$0x3f]
    %v51 = vld [vmem:[#allocation3 + $0x8] sm:$0x3f]
    %v52 = vld [vmem:[#allocation3 + $0x10] sm:$0x3f]
    %v53 = vld [vmem:[#allocation3 + $0x18] sm:$0x3f]
    %v54 = vld [vmem:[%s3] sm:$0xf]
    %v56 = vperm.slane %v54, 0
    %v57 = vperm.slane %v54, 1
    %v58 = vperm.slane %v54, 2
    %v59 = vperm.slane %v54, 3
    %vm64 = vcmask 48128
    %v66 = vsel %vm64, %v48, 0
    %v69 = vsel %vm64, %v49, 0
    %vm71 = vcmask 1045504
    %v73 = vsel %vm71, %v50, 0
    %v76 = vsel %vm71, %v51, 0
    %v79 = vsel %vm71, %v52, 0
    %v82 = vsel %vm71, %v53, 0
    %84 = vmatpush.msra.mxu0 0.0
    %85 = vmatpush.msra.mxu0 0.0
    %86 = vmatpush.msra.mxu0 0.0
    %87 = vmatpush.msra.mxu0 0.0
    %88 = vmatpush.msra.mxu0 0.0
    %89 = vmatpush.msra.mxu0 0.0
    %90 = vmatpush.msra.mxu0 0.0
    %91 = vmatpush.msra.mxu0 0.0
    %92 = vmatpush.msra.mxu0 0.0
    %93 = vmatpush.msra.mxu0 0.0
    %94 = vmatpush.msra.mxu0 0.0
    %95 = vmatpush.msra.mxu0 0.0
    %96 = vmatpush.msra.mxu0 0.0
    %97 = vmatpush.msra.mxu0 0.0
    %98 = vmatpush.msra.mxu0 0.0
    %99 = vmatpush.msra.mxu0 %v73
    %100 = vmatmul.f32.gmra.mxu0 %v66
    %v101 = vpop.f32.mrf.mxu0
    %v102 = vadd.f32 %v56, %v101
    %103 = vmatmul.f32.gmra.mxu0 %v69
    %v104 = vpop.f32.mrf.mxu0
    %v105 = vadd.f32 %v56, %v104
    %106 = vdwg.mxu0
    %107 = vmatpush.msra.mxu0 0.0
    %108 = vmatpush.msra.mxu0 0.0
    %109 = vmatpush.msra.mxu0 0.0
    %110 = vmatpush.msra.mxu0 0.0
    %111 = vmatpush.msra.mxu0 0.0
    %112 = vmatpush.msra.mxu0 0.0
    %113 = vmatpush.msra.mxu0 0.0
    %114 = vmatpush.msra.mxu0 0.0
    %115 = vmatpush.msra.mxu0 0.0
    %116 = vmatpush.msra.mxu0 0.0
    %117 = vmatpush.msra.mxu0 0.0
    %118 = vmatpush.msra.mxu0 0.0
    %119 = vmatpush.msra.mxu0 0.0
    %120 = vmatpush.msra.mxu0 0.0
    %121 = vmatpush.msra.mxu0 0.0
    %122 = vmatpush.msra.mxu0 %v76
    %123 = vmatmul.f32.gmra.mxu0 %v66
    %v124 = vpop.f32.mrf.mxu0
    %v125 = vadd.f32 %v57, %v124
    %126 = vmatmul.f32.gmra.mxu0 %v69
    %v127 = vpop.f32.mrf.mxu0
    %v128 = vadd.f32 %v57, %v127
    %129 = vdwg.mxu0
    %130 = vmatpush.msra.mxu0 0.0
    %131 = vmatpush.msra.mxu0 0.0
    %132 = vmatpush.msra.mxu0 0.0
    %133 = vmatpush.msra.mxu0 0.0
    %134 = vmatpush.msra.mxu0 0.0
    %135 = vmatpush.msra.mxu0 0.0
    %136 = vmatpush.msra.mxu0 0.0
    %137 = vmatpush.msra.mxu0 0.0
    %138 = vmatpush.msra.mxu0 0.0
    %139 = vmatpush.msra.mxu0 0.0
    %140 = vmatpush.msra.mxu0 0.0
    %141 = vmatpush.msra.mxu0 0.0
    %142 = vmatpush.msra.mxu0 0.0
    %143 = vmatpush.msra.mxu0 0.0
    %144 = vmatpush.msra.mxu0 0.0
    %145 = vmatpush.msra.mxu0 %v79
    %146 = vmatmul.f32.gmra.mxu0 %v66
    %v147 = vpop.f32.mrf.mxu0
    %v148 = vadd.f32 %v58, %v147
    %149 = vmatmul.f32.gmra.mxu0 %v69
    %v150 = vpop.f32.mrf.mxu0
    %v151 = vadd.f32 %v58, %v150
    %152 = vdwg.mxu0
    %153 = vmatpush.msra.mxu0 0.0
    %154 = vmatpush.msra.mxu0 0.0
    %155 = vmatpush.msra.mxu0 0.0
    %156 = vmatpush.msra.mxu0 0.0
    %157 = vmatpush.msra.mxu0 0.0
    %158 = vmatpush.msra.mxu0 0.0
    %159 = vmatpush.msra.mxu0 0.0
    %160 = vmatpush.msra.mxu0 0.0
    %161 = vmatpush.msra.mxu0 0.0
    %162 = vmatpush.msra.mxu0 0.0
    %163 = vmatpush.msra.mxu0 0.0
    %164 = vmatpush.msra.mxu0 0.0
    %165 = vmatpush.msra.mxu0 0.0
    %166 = vmatpush.msra.mxu0 0.0
    %167 = vmatpush.msra.mxu0 0.0
    %168 = vmatpush.msra.mxu0 %v82
    %169 = vmatmul.f32.gmra.mxu0 %v66
    %v170 = vpop.f32.mrf.mxu0
    %v171 = vadd.f32 %v59, %v170
    %172 = vmatmul.f32.gmra.mxu0 %v69
    %v173 = vpop.f32.mrf.mxu0
    %v174 = vadd.f32 %v59, %v173
    %175 = vdwg.mxu0
    %176 = vst [vmem:[#allocation2] sm:$0xff] %v102
    %177 = vst [vmem:[#allocation2 + $0x8] sm:$0xff] %v125
    %178 = vst [vmem:[#allocation2 + $0x10] sm:$0xff] %v148
    %179 = vst [vmem:[#allocation2 + $0x18] sm:$0xff] %v171
    %180 = vst [vmem:[#allocation2 + $0x20] sm:$0xff] %v105
    %181 = vst [vmem:[#allocation2 + $0x28] sm:$0xff] %v128
    %182 = vst [vmem:[#allocation2 + $0x30] sm:$0xff] %v151
    %183 = vst [vmem:[#allocation2 + $0x38] sm:$0xff] %v174
    %v184 = vld [vmem:[#allocation2] sm:$0x3]
    %v185 = vld [vmem:[#allocation2 + $0x8] sm:$0x3]
    %v186 = vld [vmem:[#allocation2 + $0x10] sm:$0x3]
    %v187 = vld [vmem:[#allocation2 + $0x18] sm:$0x3]
    %v188 = vld [vmem:[#allocation6] sm:$0xff]
    %v189 = vld [vmem:[#allocation6 + $0x8] sm:$0xff]
    %v190 = vld [vmem:[#allocation6 + $0x10] sm:$0xff]
    %v191 = vld [vmem:[#allocation6 + $0x18] sm:$0xff]
    %v192 = vld [vmem:[#allocation6 + $0x20] sm:$0xff]
    %v193 = vld [vmem:[#allocation6 + $0x28] sm:$0xff]
    %v194 = vld [vmem:[#allocation6 + $0x30] sm:$0xff]
    %v195 = vld [vmem:[#allocation6 + $0x38] sm:$0xff]
    %v196 = vld [vmem:[#allocation6 + $0x40] sm:$0xff]
    %v197 = vld [vmem:[#allocation6 + $0x48] sm:$0xff]
    %v198 = vld [vmem:[#allocation6 + $0x50] sm:$0xff]
    %v199 = vld [vmem:[#allocation6 + $0x58] sm:$0xff]
    %v200 = vld [vmem:[#allocation6 + $0x60] sm:$0xff]
    %v201 = vld [vmem:[#allocation6 + $0x68] sm:$0xff]
    %v202 = vld [vmem:[#allocation6 + $0x70] sm:$0xff]
    %v203 = vld [vmem:[#allocation6 + $0x78] sm:$0xff]
    %v204 = vld [vmem:[#allocation6 + $0x80] sm:$0xff]
    %v205 = vld [vmem:[#allocation6 + $0x88] sm:$0xff]
    %v206 = vld [vmem:[#allocation6 + $0x90] sm:$0xff]
    %v207 = vld [vmem:[#allocation6 + $0x98] sm:$0xff]
    %v208 = vld [vmem:[#allocation6 + $0xa0] sm:$0xff]
    %v209 = vld [vmem:[#allocation6 + $0xa8] sm:$0xff]
    %v210 = vld [vmem:[#allocation6 + $0xb0] sm:$0xff]
    %v211 = vld [vmem:[#allocation6 + $0xb8] sm:$0xff]
    %v212 = vld [vmem:[#allocation6 + $0xc0] sm:$0xff]
    %v213 = vld [vmem:[#allocation6 + $0xc8] sm:$0xff]
    %v214 = vld [vmem:[#allocation6 + $0xd0] sm:$0xff]
    %v215 = vld [vmem:[#allocation6 + $0xd8] sm:$0xff]
    %v216 = vld [vmem:[#allocation6 + $0xe0] sm:$0xff]
    %v217 = vld [vmem:[#allocation6 + $0xe8] sm:$0xff]
    %v218 = vld [vmem:[#allocation6 + $0xf0] sm:$0xff]
    %v219 = vld [vmem:[#allocation6 + $0xf8] sm:$0xff]
    %v220 = vld [vmem:[#allocation6 + $0x100] sm:$0xff]
    %v221 = vld [vmem:[#allocation6 + $0x108] sm:$0xff]
    %v222 = vld [vmem:[#allocation6 + $0x110] sm:$0xff]
    %v223 = vld [vmem:[#allocation6 + $0x118] sm:$0xff]
    %v224 = vld [vmem:[#allocation6 + $0x120] sm:$0xff]
    %v225 = vld [vmem:[#allocation6 + $0x128] sm:$0xff]
    %v226 = vld [vmem:[#allocation6 + $0x130] sm:$0xff]
    %v227 = vld [vmem:[#allocation6 + $0x138] sm:$0xff]
    %v228 = vld [vmem:[#allocation6 + $0x140] sm:$0xff]
    %v229 = vld [vmem:[#allocation6 + $0x148] sm:$0xff]
    %v230 = vld [vmem:[#allocation6 + $0x150] sm:$0xff]
    %v231 = vld [vmem:[#allocation6 + $0x158] sm:$0xff]
    %v232 = vld [vmem:[#allocation6 + $0x160] sm:$0xff]
    %v233 = vld [vmem:[#allocation6 + $0x168] sm:$0xff]
    %v234 = vld [vmem:[#allocation6 + $0x170] sm:$0xff]
    %v235 = vld [vmem:[#allocation6 + $0x178] sm:$0xff]
    %v236 = vld [vmem:[#allocation6 + $0x180] sm:$0xff]
    %v237 = vld [vmem:[#allocation6 + $0x188] sm:$0xff]
    %v238 = vld [vmem:[#allocation6 + $0x190] sm:$0xff]
    %v239 = vld [vmem:[#allocation6 + $0x198] sm:$0xff]
    %v240 = vld [vmem:[#allocation6 + $0x1a0] sm:$0xff]
    %v241 = vld [vmem:[#allocation6 + $0x1a8] sm:$0xff]
    %v242 = vld [vmem:[#allocation6 + $0x1b0] sm:$0xff]
    %v243 = vld [vmem:[#allocation6 + $0x1b8] sm:$0xff]
    %v244 = vld [vmem:[#allocation6 + $0x1c0] sm:$0xff]
    %v245 = vld [vmem:[#allocation6 + $0x1c8] sm:$0xff]
    %v246 = vld [vmem:[#allocation6 + $0x1d0] sm:$0xff]
    %v247 = vld [vmem:[#allocation6 + $0x1d8] sm:$0xff]
    %v248 = vld [vmem:[#allocation6 + $0x1e0] sm:$0xff]
    %v249 = vld [vmem:[#allocation6 + $0x1e8] sm:$0xff]
    %v250 = vld [vmem:[#allocation6 + $0x1f0] sm:$0xff]
    %v251 = vld [vmem:[#allocation6 + $0x1f8] sm:$0xff]
    %252 = vmatpush.msra.mxu0 %v248
    %253 = vmatpush.msra.mxu0 %v244
    %254 = vmatpush.msra.mxu0 %v240
    %255 = vmatpush.msra.mxu0 %v236
    %256 = vmatpush.msra.mxu0 %v232
    %257 = vmatpush.msra.mxu0 %v228
    %258 = vmatpush.msra.mxu0 %v224
    %259 = vmatpush.msra.mxu0 %v220
    %260 = vmatpush.msra.mxu0 %v216
    %261 = vmatpush.msra.mxu0 %v212
    %262 = vmatpush.msra.mxu0 %v208
    %263 = vmatpush.msra.mxu0 %v204
    %264 = vmatpush.msra.mxu0 %v200
    %265 = vmatpush.msra.mxu0 %v196
    %266 = vmatpush.msra.mxu0 %v192
    %267 = vmatpush.msra.mxu0 %v188
    %268 = vmatmul.f32.gmra.mxu0 0.0
    %v269 = vpop.f32.mrf.mxu0
    %v270 = vadd.f32 0.0, %v269
    %271 = vdwg.mxu0
    %272 = vmatpush.msra.mxu0 %v249
    %273 = vmatpush.msra.mxu0 %v245
    %274 = vmatpush.msra.mxu0 %v241
    %275 = vmatpush.msra.mxu0 %v237
    %276 = vmatpush.msra.mxu0 %v233
    %277 = vmatpush.msra.mxu0 %v229
    %278 = vmatpush.msra.mxu0 %v225
    %279 = vmatpush.msra.mxu0 %v221
    %280 = vmatpush.msra.mxu0 %v217
    %281 = vmatpush.msra.mxu0 %v213
    %282 = vmatpush.msra.mxu0 %v209
    %283 = vmatpush.msra.mxu0 %v205
    %284 = vmatpush.msra.mxu0 %v201
    %285 = vmatpush.msra.mxu0 %v197
    %286 = vmatpush.msra.mxu0 %v193
    %287 = vmatpush.msra.mxu0 %v189
    %288 = vmatmul.f32.gmra.mxu0 0.0
    %v289 = vpop.f32.mrf.mxu0
    %v290 = vadd.f32 0.0, %v289
    %291 = vdwg.mxu0
    %292 = vmatpush.msra.mxu0 %v250
    %293 = vmatpush.msra.mxu0 %v246
    %294 = vmatpush.msra.mxu0 %v242
    %295 = vmatpush.msra.mxu0 %v238
    %296 = vmatpush.msra.mxu0 %v234
    %297 = vmatpush.msra.mxu0 %v230
    %298 = vmatpush.msra.mxu0 %v226
    %299 = vmatpush.msra.mxu0 %v222
    %300 = vmatpush.msra.mxu0 %v218
    %301 = vmatpush.msra.mxu0 %v214
    %302 = vmatpush.msra.mxu0 %v210
    %303 = vmatpush.msra.mxu0 %v206
    %304 = vmatpush.msra.mxu0 %v202
    %305 = vmatpush.msra.mxu0 %v198
    %306 = vmatpush.msra.mxu0 %v194
    %307 = vmatpush.msra.mxu0 %v190
    %308 = vmatmul.f32.gmra.mxu0 0.0
    %v309 = vpop.f32.mrf.mxu0
    %v310 = vadd.f32 0.0, %v309
    %311 = vdwg.mxu0
    %312 = vmatpush.msra.mxu0 %v251
    %313 = vmatpush.msra.mxu0 %v247
    %314 = vmatpush.msra.mxu0 %v243
    %315 = vmatpush.msra.mxu0 %v239
    %316 = vmatpush.msra.mxu0 %v235
    %317 = vmatpush.msra.mxu0 %v231
    %318 = vmatpush.msra.mxu0 %v227
    %319 = vmatpush.msra.mxu0 %v223
    %320 = vmatpush.msra.mxu0 %v219
    %321 = vmatpush.msra.mxu0 %v215
    %322 = vmatpush.msra.mxu0 %v211
    %323 = vmatpush.msra.mxu0 %v207
    %324 = vmatpush.msra.mxu0 %v203
    %325 = vmatpush.msra.mxu0 %v199
    %326 = vmatpush.msra.mxu0 %v195
    %327 = vmatpush.msra.mxu0 %v191
    %328 = vmatmul.f32.gmra.mxu0 0.0
    %v329 = vpop.f32.mrf.mxu0
    %v330 = vadd.f32 0.0, %v329
    %331 = vdwg.mxu0
    %v332 = vadd.f32 %v184, %v270
    %v333 = vadd.f32 %v185, %v290
    %v334 = vadd.f32 %v186, %v310
    %v335 = vadd.f32 %v187, %v330
    %v336 = vxor.u32 %v332, 2147483648
    %v337 = vmul.f32 %v336, 1.442695
    %v338 = vpow.pop %v337
    %v339 = vadd.f32 %v338, 1.0
    %v340 = vrcp.pop %v339
    %v341 = vmul.f32 %v339, %v340
    %v342 = vsub.f32 1.0, %v341
    %v343 = vmul.f32 %v340, %v342
    %v344 = vadd.f32 %v340, %v343
    %vm345 = vweird.f32 %v339
    %vm346 = vweird.f32 %v340
    %vm347 = vmor %vm345, %vm346
    %v348 = vsel %vm347, %v340, %v344
    %v349 = vand.u32 2147483647, %v339
    %vm350 = vcmp.eq.f32.partialorder %v349, 8.507059e+37
    %v351 = vand.u32 %v339, 2147483648
    %v352 = vor.u32 1.1754944e-38, %v351
    %v353 = vsel %vm350, %v352, %v348
    %v354 = vmul.f32 1.0, %v353
    %v355 = vxor.u32 %v333, 2147483648
    %v356 = vmul.f32 %v355, 1.442695
    %v357 = vpow.pop %v356
    %v358 = vadd.f32 %v357, 1.0
    %v359 = vrcp.pop %v358
    %v360 = vmul.f32 %v358, %v359
    %v361 = vsub.f32 1.0, %v360
    %v362 = vmul.f32 %v359, %v361
    %v363 = vadd.f32 %v359, %v362
    %vm364 = vweird.f32 %v358
    %vm365 = vweird.f32 %v359
    %vm366 = vmor %vm364, %vm365
    %v367 = vsel %vm366, %v359, %v363
    %v368 = vand.u32 2147483647, %v358
    %vm369 = vcmp.eq.f32.partialorder %v368, 8.507059e+37
    %v370 = vand.u32 %v358, 2147483648
    %v371 = vor.u32 1.1754944e-38, %v370
    %v372 = vsel %vm369, %v371, %v367
    %v373 = vmul.f32 1.0, %v372
    %v374 = vtanh.pop %v334
    %v375 = vxor.u32 %v335, 2147483648
    %v376 = vmul.f32 %v375, 1.442695
    %v377 = vpow.pop %v376
    %v378 = vadd.f32 %v377, 1.0
    %v379 = vrcp.pop %v378
    %v380 = vmul.f32 %v378, %v379
    %v381 = vsub.f32 1.0, %v380
    %v382 = vmul.f32 %v379, %v381
    %v383 = vadd.f32 %v379, %v382
    %vm384 = vweird.f32 %v378
    %vm385 = vweird.f32 %v379
    %vm386 = vmor %vm384, %vm385
    %v387 = vsel %vm386, %v379, %v383
    %v388 = vand.u32 2147483647, %v378
    %vm389 = vcmp.eq.f32.partialorder %v388, 8.507059e+37
    %v390 = vand.u32 %v378, 2147483648
    %v391 = vor.u32 1.1754944e-38, %v390
    %v392 = vsel %vm389, %v391, %v387
    %v393 = vmul.f32 1.0, %v392
    %v394 = vmul.f32 %v373, 0.0
    %v395 = vmul.f32 %v354, %v374
    %v396 = vadd.f32 %v394, %v395
    %v397 = vtanh.pop %v396
    %v398 = vmul.f32 %v393, %v397
    %v399 = vld [vmem:[#allocation2] sm:$0xc]
    %v400 = vld [vmem:[#allocation2 + $0x8] sm:$0xc]
    %v401 = vld [vmem:[#allocation2 + $0x10] sm:$0xc]
    %v402 = vld [vmem:[#allocation2 + $0x18] sm:$0xc]
    %403 = vmatpush.msra.mxu0 %v248
    %404 = vmatpush.msra.mxu0 %v244
    %405 = vmatpush.msra.mxu0 %v240
    %406 = vmatpush.msra.mxu0 %v236
    %407 = vmatpush.msra.mxu0 %v232
    %408 = vmatpush.msra.mxu0 %v228
    %409 = vmatpush.msra.mxu0 %v224
    %410 = vmatpush.msra.mxu0 %v220
    %411 = vmatpush.msra.mxu0 %v216
    %412 = vmatpush.msra.mxu0 %v212
    %413 = vmatpush.msra.mxu0 %v208
    %414 = vmatpush.msra.mxu0 %v204
    %415 = vmatpush.msra.mxu0 %v200
    %416 = vmatpush.msra.mxu0 %v196
    %417 = vmatpush.msra.mxu0 %v192
    %418 = vmatpush.msra.mxu0 %v188
    %419 = vmatmul.f32.gmra.mxu0 %v398
    %v420 = vpop.f32.mrf.mxu0
    %v421 = vadd.f32 0.0, %v420
    %422 = vdwg.mxu0
    %423 = vmatpush.msra.mxu0 %v249
    %424 = vmatpush.msra.mxu0 %v245
    %425 = vmatpush.msra.mxu0 %v241
    %426 = vmatpush.msra.mxu0 %v237
    %427 = vmatpush.msra.mxu0 %v233
    %428 = vmatpush.msra.mxu0 %v229
    %429 = vmatpush.msra.mxu0 %v225
    %430 = vmatpush.msra.mxu0 %v221
    %431 = vmatpush.msra.mxu0 %v217
    %432 = vmatpush.msra.mxu0 %v213
    %433 = vmatpush.msra.mxu0 %v209
    %434 = vmatpush.msra.mxu0 %v205
    %435 = vmatpush.msra.mxu0 %v201
    %436 = vmatpush.msra.mxu0 %v197
    %437 = vmatpush.msra.mxu0 %v193
    %438 = vmatpush.msra.mxu0 %v189
    %439 = vmatmul.f32.gmra.mxu0 %v398
    %v440 = vpop.f32.mrf.mxu0
    %v441 = vadd.f32 0.0, %v440
    %442 = vdwg.mxu0
    %443 = vmatpush.msra.mxu0 %v250
    %444 = vmatpush.msra.mxu0 %v246
    %445 = vmatpush.msra.mxu0 %v242
    %446 = vmatpush.msra.mxu0 %v238
    %447 = vmatpush.msra.mxu0 %v234
    %448 = vmatpush.msra.mxu0 %v230
    %449 = vmatpush.msra.mxu0 %v226
    %450 = vmatpush.msra.mxu0 %v222
    %451 = vmatpush.msra.mxu0 %v218
    %452 = vmatpush.msra.mxu0 %v214
    %453 = vmatpush.msra.mxu0 %v210
    %454 = vmatpush.msra.mxu0 %v206
    %455 = vmatpush.msra.mxu0 %v202
    %456 = vmatpush.msra.mxu0 %v198
    %457 = vmatpush.msra.mxu0 %v194
    %458 = vmatpush.msra.mxu0 %v190
    %459 = vmatmul.f32.gmra.mxu0 %v398
    %v460 = vpop.f32.mrf.mxu0
    %v461 = vadd.f32 0.0, %v460
    %462 = vdwg.mxu0
    %463 = vmatpush.msra.mxu0 %v251
    %464 = vmatpush.msra.mxu0 %v247
    %465 = vmatpush.msra.mxu0 %v243
    %466 = vmatpush.msra.mxu0 %v239
    %467 = vmatpush.msra.mxu0 %v235
    %468 = vmatpush.msra.mxu0 %v231
    %469 = vmatpush.msra.mxu0 %v227
    %470 = vmatpush.msra.mxu0 %v223
    %471 = vmatpush.msra.mxu0 %v219
    %472 = vmatpush.msra.mxu0 %v215
    %473 = vmatpush.msra.mxu0 %v211
    %474 = vmatpush.msra.mxu0 %v207
    %475 = vmatpush.msra.mxu0 %v203
    %476 = vmatpush.msra.mxu0 %v199
    %477 = vmatpush.msra.mxu0 %v195
    %478 = vmatpush.msra.mxu0 %v191
    %479 = vmatmul.f32.gmra.mxu0 %v398
    %v480 = vpop.f32.mrf.mxu0
    %v481 = vadd.f32 0.0, %v480
    %482 = vdwg.mxu0
    %v487 = vrot.slane %v421, 6
    %v488 = vrot.slane %v441, 6
    %v489 = vrot.slane %v461, 6
    %v490 = vrot.slane %v481, 6
    %v495 = vadd.f32 %v399, %v487
    %v496 = vadd.f32 %v400, %v488
    %v497 = vadd.f32 %v401, %v489
    %v498 = vadd.f32 %v402, %v490
    %v499 = vxor.u32 %v495, 2147483648
    %v500 = vmul.f32 %v499, 1.442695
    %v501 = vpow.pop %v500
    %v502 = vadd.f32 %v501, 1.0
    %v503 = vrcp.pop %v502
    %v504 = vmul.f32 %v502, %v503
    %v505 = vsub.f32 1.0, %v504
    %v506 = vmul.f32 %v503, %v505
    %v507 = vadd.f32 %v503, %v506
    %vm508 = vweird.f32 %v502
    %vm509 = vweird.f32 %v503
    %vm510 = vmor %vm508, %vm509
    %v511 = vsel %vm510, %v503, %v507
    %v512 = vand.u32 2147483647, %v502
    %vm513 = vcmp.eq.f32.partialorder %v512, 8.507059e+37
    %v514 = vand.u32 %v502, 2147483648
    %v515 = vor.u32 1.1754944e-38, %v514
    %v516 = vsel %vm513, %v515, %v511
    %v517 = vmul.f32 1.0, %v516
    %v518 = vxor.u32 %v496, 2147483648
    %v519 = vmul.f32 %v518, 1.442695
    %v520 = vpow.pop %v519
    %v521 = vadd.f32 %v520, 1.0
    %v522 = vrcp.pop %v521
    %v523 = vmul.f32 %v521, %v522
    %v524 = vsub.f32 1.0, %v523
    %v525 = vmul.f32 %v522, %v524
    %v526 = vadd.f32 %v522, %v525
    %vm527 = vweird.f32 %v521
    %vm528 = vweird.f32 %v522
    %vm529 = vmor %vm527, %vm528
    %v530 = vsel %vm529, %v522, %v526
    %v531 = vand.u32 2147483647, %v521
    %vm532 = vcmp.eq.f32.partialorder %v531, 8.507059e+37
    %v533 = vand.u32 %v521, 2147483648
    %v534 = vor.u32 1.1754944e-38, %v533
    %v535 = vsel %vm532, %v534, %v530
    %v536 = vmul.f32 1.0, %v535
    %v537 = vtanh.pop %v497
    %v538 = vxor.u32 %v498, 2147483648
    %v539 = vmul.f32 %v538, 1.442695
    %v540 = vpow.pop %v539
    %v541 = vadd.f32 %v540, 1.0
    %v542 = vrcp.pop %v541
    %v543 = vmul.f32 %v541, %v542
    %v544 = vsub.f32 1.0, %v543
    %v545 = vmul.f32 %v542, %v544
    %v546 = vadd.f32 %v542, %v545
    %vm547 = vweird.f32 %v541
    %vm548 = vweird.f32 %v542
    %vm549 = vmor %vm547, %vm548
    %v550 = vsel %vm549, %v542, %v546
    %v551 = vand.u32 2147483647, %v541
    %vm552 = vcmp.eq.f32.partialorder %v551, 8.507059e+37
    %v553 = vand.u32 %v541, 2147483648
    %v554 = vor.u32 1.1754944e-38, %v553
    %v555 = vsel %vm552, %v554, %v550
    %v556 = vmul.f32 1.0, %v555
    %v558 = vrot.slane %v396, 6
    %v560 = vmul.f32 %v536, %v558
    %v561 = vmul.f32 %v517, %v537
    %v562 = vadd.f32 %v560, %v561
    %v563 = vtanh.pop %v562
    %v564 = vmul.f32 %v556, %v563
    %v565 = vld [vmem:[#allocation2] sm:$0x30]
    %v566 = vld [vmem:[#allocation2 + $0x8] sm:$0x30]
    %v567 = vld [vmem:[#allocation2 + $0x10] sm:$0x30]
    %v568 = vld [vmem:[#allocation2 + $0x18] sm:$0x30]
    %v570 = vrot.slane %v564, 2
    %572 = vmatpush.msra.mxu0 %v248
    %573 = vmatpush.msra.mxu0 %v244
    %574 = vmatpush.msra.mxu0 %v240
    %575 = vmatpush.msra.mxu0 %v236
    %576 = vmatpush.msra.mxu0 %v232
    %577 = vmatpush.msra.mxu0 %v228
    %578 = vmatpush.msra.mxu0 %v224
    %579 = vmatpush.msra.mxu0 %v220
    %580 = vmatpush.msra.mxu0 %v216
    %581 = vmatpush.msra.mxu0 %v212
    %582 = vmatpush.msra.mxu0 %v208
    %583 = vmatpush.msra.mxu0 %v204
    %584 = vmatpush.msra.mxu0 %v200
    %585 = vmatpush.msra.mxu0 %v196
    %586 = vmatpush.msra.mxu0 %v192
    %587 = vmatpush.msra.mxu0 %v188
    %588 = vmatmul.f32.gmra.mxu0 %v570
    %v589 = vpop.f32.mrf.mxu0
    %v590 = vadd.f32 0.0, %v589
    %591 = vdwg.mxu0
    %592 = vmatpush.msra.mxu0 %v249
    %593 = vmatpush.msra.mxu0 %v245
    %594 = vmatpush.msra.mxu0 %v241
    %595 = vmatpush.msra.mxu0 %v237
    %596 = vmatpush.msra.mxu0 %v233
    %597 = vmatpush.msra.mxu0 %v229
    %598 = vmatpush.msra.mxu0 %v225
    %599 = vmatpush.msra.mxu0 %v221
    %600 = vmatpush.msra.mxu0 %v217
    %601 = vmatpush.msra.mxu0 %v213
    %602 = vmatpush.msra.mxu0 %v209
    %603 = vmatpush.msra.mxu0 %v205
    %604 = vmatpush.msra.mxu0 %v201
    %605 = vmatpush.msra.mxu0 %v197
    %606 = vmatpush.msra.mxu0 %v193
    %607 = vmatpush.msra.mxu0 %v189
    %608 = vmatmul.f32.gmra.mxu0 %v570
    %v609 = vpop.f32.mrf.mxu0
    %v610 = vadd.f32 0.0, %v609
    %611 = vdwg.mxu0
    %612 = vmatpush.msra.mxu0 %v250
    %613 = vmatpush.msra.mxu0 %v246
    %614 = vmatpush.msra.mxu0 %v242
    %615 = vmatpush.msra.mxu0 %v238
    %616 = vmatpush.msra.mxu0 %v234
    %617 = vmatpush.msra.mxu0 %v230
    %618 = vmatpush.msra.mxu0 %v226
    %619 = vmatpush.msra.mxu0 %v222
    %620 = vmatpush.msra.mxu0 %v218
    %621 = vmatpush.msra.mxu0 %v214
    %622 = vmatpush.msra.mxu0 %v210
    %623 = vmatpush.msra.mxu0 %v206
    %624 = vmatpush.msra.mxu0 %v202
    %625 = vmatpush.msra.mxu0 %v198
    %626 = vmatpush.msra.mxu0 %v194
    %627 = vmatpush.msra.mxu0 %v190
    %628 = vmatmul.f32.gmra.mxu0 %v570
    %v629 = vpop.f32.mrf.mxu0
    %v630 = vadd.f32 0.0, %v629
    %631 = vdwg.mxu0
    %632 = vmatpush.msra.mxu0 %v251
    %633 = vmatpush.msra.mxu0 %v247
    %634 = vmatpush.msra.mxu0 %v243
    %635 = vmatpush.msra.mxu0 %v239
    %636 = vmatpush.msra.mxu0 %v235
    %637 = vmatpush.msra.mxu0 %v231
    %638 = vmatpush.msra.mxu0 %v227
    %639 = vmatpush.msra.mxu0 %v223
    %640 = vmatpush.msra.mxu0 %v219
    %641 = vmatpush.msra.mxu0 %v215
    %642 = vmatpush.msra.mxu0 %v211
    %643 = vmatpush.msra.mxu0 %v207
    %644 = vmatpush.msra.mxu0 %v203
    %645 = vmatpush.msra.mxu0 %v199
    %646 = vmatpush.msra.mxu0 %v195
    %647 = vmatpush.msra.mxu0 %v191
    %648 = vmatmul.f32.gmra.mxu0 %v570
    %v649 = vpop.f32.mrf.mxu0
    %v650 = vadd.f32 0.0, %v649
    %651 = vdwg.mxu0
    %v656 = vrot.slane %v590, 4
    %v657 = vrot.slane %v610, 4
    %v658 = vrot.slane %v630, 4
    %v659 = vrot.slane %v650, 4
    %v664 = vadd.f32 %v565, %v656
    %v665 = vadd.f32 %v566, %v657
    %v666 = vadd.f32 %v567, %v658
    %v667 = vadd.f32 %v568, %v659
    %v668 = vxor.u32 %v664, 2147483648
    %v669 = vmul.f32 %v668, 1.442695
    %v670 = vpow.pop %v669
    %v671 = vadd.f32 %v670, 1.0
    %v672 = vrcp.pop %v671
    %v673 = vmul.f32 %v671, %v672
    %v674 = vsub.f32 1.0, %v673
    %v675 = vmul.f32 %v672, %v674
    %v676 = vadd.f32 %v672, %v675
    %vm677 = vweird.f32 %v671
    %vm678 = vweird.f32 %v672
    %vm679 = vmor %vm677, %vm678
    %v680 = vsel %vm679, %v672, %v676
    %v681 = vand.u32 2147483647, %v671
    %vm682 = vcmp.eq.f32.partialorder %v681, 8.507059e+37
    %v683 = vand.u32 %v671, 2147483648
    %v684 = vor.u32 1.1754944e-38, %v683
    %v685 = vsel %vm682, %v684, %v680
    %v686 = vmul.f32 1.0, %v685
    %v687 = vxor.u32 %v665, 2147483648
    %v688 = vmul.f32 %v687, 1.442695
    %v689 = vpow.pop %v688
    %v690 = vadd.f32 %v689, 1.0
    %v691 = vrcp.pop %v690
    %v692 = vmul.f32 %v690, %v691
    %v693 = vsub.f32 1.0, %v692
    %v694 = vmul.f32 %v691, %v693
    %v695 = vadd.f32 %v691, %v694
    %vm696 = vweird.f32 %v690
    %vm697 = vweird.f32 %v691
    %vm698 = vmor %vm696, %vm697
    %v699 = vsel %vm698, %v691, %v695
    %v700 = vand.u32 2147483647, %v690
    %vm701 = vcmp.eq.f32.partialorder %v700, 8.507059e+37
    %v702 = vand.u32 %v690, 2147483648
    %v703 = vor.u32 1.1754944e-38, %v702
    %v704 = vsel %vm701, %v703, %v699
    %v705 = vmul.f32 1.0, %v704
    %v706 = vtanh.pop %v666
    %v707 = vxor.u32 %v667, 2147483648
    %v708 = vmul.f32 %v707, 1.442695
    %v709 = vpow.pop %v708
    %v710 = vadd.f32 %v709, 1.0
    %v711 = vrcp.pop %v710
    %v712 = vmul.f32 %v710, %v711
    %v713 = vsub.f32 1.0, %v712
    %v714 = vmul.f32 %v711, %v713
    %v715 = vadd.f32 %v711, %v714
    %vm716 = vweird.f32 %v710
    %vm717 = vweird.f32 %v711
    %vm718 = vmor %vm716, %vm717
    %v719 = vsel %vm718, %v711, %v715
    %v720 = vand.u32 2147483647, %v710
    %vm721 = vcmp.eq.f32.partialorder %v720, 8.507059e+37
    %v722 = vand.u32 %v710, 2147483648
    %v723 = vor.u32 1.1754944e-38, %v722
    %v724 = vsel %vm721, %v723, %v719
    %v725 = vmul.f32 1.0, %v724
    %v727 = vrot.slane %v562, 6
    %v729 = vmul.f32 %v705, %v727
    %v730 = vmul.f32 %v686, %v706
    %v731 = vadd.f32 %v729, %v730
    %v732 = vtanh.pop %v731
    %v733 = vmul.f32 %v725, %v732
    %v734 = vld [vmem:[#allocation2] sm:$0xc0]
    %v735 = vld [vmem:[#allocation2 + $0x8] sm:$0xc0]
    %v736 = vld [vmem:[#allocation2 + $0x10] sm:$0xc0]
    %v737 = vld [vmem:[#allocation2 + $0x18] sm:$0xc0]
    %v739 = vrot.slane %v733, 4
    %741 = vmatpush.msra.mxu0 %v248
    %742 = vmatpush.msra.mxu0 %v244
    %743 = vmatpush.msra.mxu0 %v240
    %744 = vmatpush.msra.mxu0 %v236
    %745 = vmatpush.msra.mxu0 %v232
    %746 = vmatpush.msra.mxu0 %v228
    %747 = vmatpush.msra.mxu0 %v224
    %748 = vmatpush.msra.mxu0 %v220
    %749 = vmatpush.msra.mxu0 %v216
    %750 = vmatpush.msra.mxu0 %v212
    %751 = vmatpush.msra.mxu0 %v208
    %752 = vmatpush.msra.mxu0 %v204
    %753 = vmatpush.msra.mxu0 %v200
    %754 = vmatpush.msra.mxu0 %v196
    %755 = vmatpush.msra.mxu0 %v192
    %756 = vmatpush.msra.mxu0 %v188
    %757 = vmatmul.f32.gmra.mxu0 %v739
    %v758 = vpop.f32.mrf.mxu0
    %v759 = vadd.f32 0.0, %v758
    %760 = vdwg.mxu0
    %761 = vmatpush.msra.mxu0 %v249
    %762 = vmatpush.msra.mxu0 %v245
    %763 = vmatpush.msra.mxu0 %v241
    %764 = vmatpush.msra.mxu0 %v237
    %765 = vmatpush.msra.mxu0 %v233
    %766 = vmatpush.msra.mxu0 %v229
    %767 = vmatpush.msra.mxu0 %v225
    %768 = vmatpush.msra.mxu0 %v221
    %769 = vmatpush.msra.mxu0 %v217
    %770 = vmatpush.msra.mxu0 %v213
    %771 = vmatpush.msra.mxu0 %v209
    %772 = vmatpush.msra.mxu0 %v205
    %773 = vmatpush.msra.mxu0 %v201
    %774 = vmatpush.msra.mxu0 %v197
    %775 = vmatpush.msra.mxu0 %v193
    %776 = vmatpush.msra.mxu0 %v189
    %777 = vmatmul.f32.gmra.mxu0 %v739
    %v778 = vpop.f32.mrf.mxu0
    %v779 = vadd.f32 0.0, %v778
    %780 = vdwg.mxu0
    %781 = vmatpush.msra.mxu0 %v250
    %782 = vmatpush.msra.mxu0 %v246
    %783 = vmatpush.msra.mxu0 %v242
    %784 = vmatpush.msra.mxu0 %v238
    %785 = vmatpush.msra.mxu0 %v234
    %786 = vmatpush.msra.mxu0 %v230
    %787 = vmatpush.msra.mxu0 %v226
    %788 = vmatpush.msra.mxu0 %v222
    %789 = vmatpush.msra.mxu0 %v218
    %790 = vmatpush.msra.mxu0 %v214
    %791 = vmatpush.msra.mxu0 %v210
    %792 = vmatpush.msra.mxu0 %v206
    %793 = vmatpush.msra.mxu0 %v202
    %794 = vmatpush.msra.mxu0 %v198
    %795 = vmatpush.msra.mxu0 %v194
    %796 = vmatpush.msra.mxu0 %v190
    %797 = vmatmul.f32.gmra.mxu0 %v739
    %v798 = vpop.f32.mrf.mxu0
    %v799 = vadd.f32 0.0, %v798
    %800 = vdwg.mxu0
    %801 = vmatpush.msra.mxu0 %v251
    %802 = vmatpush.msra.mxu0 %v247
    %803 = vmatpush.msra.mxu0 %v243
    %804 = vmatpush.msra.mxu0 %v239
    %805 = vmatpush.msra.mxu0 %v235
    %806 = vmatpush.msra.mxu0 %v231
    %807 = vmatpush.msra.mxu0 %v227
    %808 = vmatpush.msra.mxu0 %v223
    %809 = vmatpush.msra.mxu0 %v219
    %810 = vmatpush.msra.mxu0 %v215
    %811 = vmatpush.msra.mxu0 %v211
    %812 = vmatpush.msra.mxu0 %v207
    %813 = vmatpush.msra.mxu0 %v203
    %814 = vmatpush.msra.mxu0 %v199
    %815 = vmatpush.msra.mxu0 %v195
    %816 = vmatpush.msra.mxu0 %v191
    %817 = vmatmul.f32.gmra.mxu0 %v739
    %v818 = vpop.f32.mrf.mxu0
    %v819 = vadd.f32 0.0, %v818
    %820 = vdwg.mxu0
    %v825 = vrot.slane %v759, 2
    %v826 = vrot.slane %v779, 2
    %v827 = vrot.slane %v799, 2
    %v828 = vrot.slane %v819, 2
    %v833 = vadd.f32 %v734, %v825
    %v834 = vadd.f32 %v735, %v826
    %v835 = vadd.f32 %v736, %v827
    %v836 = vadd.f32 %v737, %v828
    %v837 = vxor.u32 %v833, 2147483648
    %v838 = vmul.f32 %v837, 1.442695
    %v839 = vpow.pop %v838
    %v840 = vadd.f32 %v839, 1.0
    %v841 = vrcp.pop %v840
    %v842 = vmul.f32 %v840, %v841
    %v843 = vsub.f32 1.0, %v842
    %v844 = vmul.f32 %v841, %v843
    %v845 = vadd.f32 %v841, %v844
    %vm846 = vweird.f32 %v840
    %vm847 = vweird.f32 %v841
    %vm848 = vmor %vm846, %vm847
    %v849 = vsel %vm848, %v841, %v845
    %v850 = vand.u32 2147483647, %v840
    %vm851 = vcmp.eq.f32.partialorder %v850, 8.507059e+37
    %v852 = vand.u32 %v840, 2147483648
    %v853 = vor.u32 1.1754944e-38, %v852
    %v854 = vsel %vm851, %v853, %v849
    %v855 = vmul.f32 1.0, %v854
    %v856 = vxor.u32 %v834, 2147483648
    %v857 = vmul.f32 %v856, 1.442695
    %v858 = vpow.pop %v857
    %v859 = vadd.f32 %v858, 1.0
    %v860 = vrcp.pop %v859
    %v861 = vmul.f32 %v859, %v860
    %v862 = vsub.f32 1.0, %v861
    %v863 = vmul.f32 %v860, %v862
    %v864 = vadd.f32 %v860, %v863
    %vm865 = vweird.f32 %v859
    %vm866 = vweird.f32 %v860
    %vm867 = vmor %vm865, %vm866
    %v868 = vsel %vm867, %v860, %v864
    %v869 = vand.u32 2147483647, %v859
    %vm870 = vcmp.eq.f32.partialorder %v869, 8.507059e+37
    %v871 = vand.u32 %v859, 2147483648
    %v872 = vor.u32 1.1754944e-38, %v871
    %v873 = vsel %vm870, %v872, %v868
    %v874 = vmul.f32 1.0, %v873
    %v875 = vtanh.pop %v835
    %v876 = vxor.u32 %v836, 2147483648
    %v877 = vmul.f32 %v876, 1.442695
    %v878 = vpow.pop %v877
    %v879 = vadd.f32 %v878, 1.0
    %v880 = vrcp.pop %v879
    %v881 = vmul.f32 %v879, %v880
    %v882 = vsub.f32 1.0, %v881
    %v883 = vmul.f32 %v880, %v882
    %v884 = vadd.f32 %v880, %v883
    %vm885 = vweird.f32 %v879
    %vm886 = vweird.f32 %v880
    %vm887 = vmor %vm885, %vm886
    %v888 = vsel %vm887, %v880, %v884
    %v889 = vand.u32 2147483647, %v879
    %vm890 = vcmp.eq.f32.partialorder %v889, 8.507059e+37
    %v891 = vand.u32 %v879, 2147483648
    %v892 = vor.u32 1.1754944e-38, %v891
    %v893 = vsel %vm890, %v892, %v888
    %v894 = vmul.f32 1.0, %v893
    %v896 = vrot.slane %v731, 6
    %v898 = vmul.f32 %v874, %v896
    %v899 = vmul.f32 %v855, %v875
    %v900 = vadd.f32 %v898, %v899
    %v901 = vtanh.pop %v900
    %v902 = vmul.f32 %v894, %v901
    %v903 = vld [vmem:[#allocation2 + $0x20] sm:$0x3]
    %v904 = vld [vmem:[#allocation2 + $0x28] sm:$0x3]
    %v905 = vld [vmem:[#allocation2 + $0x30] sm:$0x3]
    %v906 = vld [vmem:[#allocation2 + $0x38] sm:$0x3]
    %v908 = vrot.slane %v902, 6
    %910 = vmatpush.msra.mxu0 %v248
    %911 = vmatpush.msra.mxu0 %v244
    %912 = vmatpush.msra.mxu0 %v240
    %913 = vmatpush.msra.mxu0 %v236
    %914 = vmatpush.msra.mxu0 %v232
    %915 = vmatpush.msra.mxu0 %v228
    %916 = vmatpush.msra.mxu0 %v224
    %917 = vmatpush.msra.mxu0 %v220
    %918 = vmatpush.msra.mxu0 %v216
    %919 = vmatpush.msra.mxu0 %v212
    %920 = vmatpush.msra.mxu0 %v208
    %921 = vmatpush.msra.mxu0 %v204
    %922 = vmatpush.msra.mxu0 %v200
    %923 = vmatpush.msra.mxu0 %v196
    %924 = vmatpush.msra.mxu0 %v192
    %925 = vmatpush.msra.mxu0 %v188
    %926 = vmatmul.f32.gmra.mxu0 %v908
    %v927 = vpop.f32.mrf.mxu0
    %v928 = vadd.f32 0.0, %v927
    %929 = vdwg.mxu0
    %930 = vmatpush.msra.mxu0 %v249
    %931 = vmatpush.msra.mxu0 %v245
    %932 = vmatpush.msra.mxu0 %v241
    %933 = vmatpush.msra.mxu0 %v237
    %934 = vmatpush.msra.mxu0 %v233
    %935 = vmatpush.msra.mxu0 %v229
    %936 = vmatpush.msra.mxu0 %v225
    %937 = vmatpush.msra.mxu0 %v221
    %938 = vmatpush.msra.mxu0 %v217
    %939 = vmatpush.msra.mxu0 %v213
    %940 = vmatpush.msra.mxu0 %v209
    %941 = vmatpush.msra.mxu0 %v205
    %942 = vmatpush.msra.mxu0 %v201
    %943 = vmatpush.msra.mxu0 %v197
    %944 = vmatpush.msra.mxu0 %v193
    %945 = vmatpush.msra.mxu0 %v189
    %946 = vmatmul.f32.gmra.mxu0 %v908
    %v947 = vpop.f32.mrf.mxu0
    %v948 = vadd.f32 0.0, %v947
    %949 = vdwg.mxu0
    %950 = vmatpush.msra.mxu0 %v250
    %951 = vmatpush.msra.mxu0 %v246
    %952 = vmatpush.msra.mxu0 %v242
    %953 = vmatpush.msra.mxu0 %v238
    %954 = vmatpush.msra.mxu0 %v234
    %955 = vmatpush.msra.mxu0 %v230
    %956 = vmatpush.msra.mxu0 %v226
    %957 = vmatpush.msra.mxu0 %v222
    %958 = vmatpush.msra.mxu0 %v218
    %959 = vmatpush.msra.mxu0 %v214
    %960 = vmatpush.msra.mxu0 %v210
    %961 = vmatpush.msra.mxu0 %v206
    %962 = vmatpush.msra.mxu0 %v202
    %963 = vmatpush.msra.mxu0 %v198
    %964 = vmatpush.msra.mxu0 %v194
    %965 = vmatpush.msra.mxu0 %v190
    %966 = vmatmul.f32.gmra.mxu0 %v908
    %v967 = vpop.f32.mrf.mxu0
    %v968 = vadd.f32 0.0, %v967
    %969 = vdwg.mxu0
    %970 = vmatpush.msra.mxu0 %v251
    %971 = vmatpush.msra.mxu0 %v247
    %972 = vmatpush.msra.mxu0 %v243
    %973 = vmatpush.msra.mxu0 %v239
    %974 = vmatpush.msra.mxu0 %v235
    %975 = vmatpush.msra.mxu0 %v231
    %976 = vmatpush.msra.mxu0 %v227
    %977 = vmatpush.msra.mxu0 %v223
    %978 = vmatpush.msra.mxu0 %v219
    %979 = vmatpush.msra.mxu0 %v215
    %980 = vmatpush.msra.mxu0 %v211
    %981 = vmatpush.msra.mxu0 %v207
    %982 = vmatpush.msra.mxu0 %v203
    %983 = vmatpush.msra.mxu0 %v199
    %984 = vmatpush.msra.mxu0 %v195
    %985 = vmatpush.msra.mxu0 %v191
    %986 = vmatmul.f32.gmra.mxu0 %v908
    %v987 = vpop.f32.mrf.mxu0
    %v988 = vadd.f32 0.0, %v987
    %989 = vdwg.mxu0
    %v990 = vadd.f32 %v903, %v928
    %v991 = vadd.f32 %v904, %v948
    %v992 = vadd.f32 %v905, %v968
    %v993 = vadd.f32 %v906, %v988
    %v994 = vxor.u32 %v990, 2147483648
    %v995 = vmul.f32 %v994, 1.442695
    %v996 = vpow.pop %v995
    %v997 = vadd.f32 %v996, 1.0
    %v998 = vrcp.pop %v997
    %v999 = vmul.f32 %v997, %v998
    %v1000 = vsub.f32 1.0, %v999
    %v1001 = vmul.f32 %v998, %v1000
    %v1002 = vadd.f32 %v998, %v1001
    %vm1003 = vweird.f32 %v997
    %vm1004 = vweird.f32 %v998
    %vm1005 = vmor %vm1003, %vm1004
    %v1006 = vsel %vm1005, %v998, %v1002
    %v1007 = vand.u32 2147483647, %v997
    %vm1008 = vcmp.eq.f32.partialorder %v1007, 8.507059e+37
    %v1009 = vand.u32 %v997, 2147483648
    %v1010 = vor.u32 1.1754944e-38, %v1009
    %v1011 = vsel %vm1008, %v1010, %v1006
    %v1012 = vmul.f32 1.0, %v1011
    %v1013 = vxor.u32 %v991, 2147483648
    %v1014 = vmul.f32 %v1013, 1.442695
    %v1015 = vpow.pop %v1014
    %v1016 = vadd.f32 %v1015, 1.0
    %v1017 = vrcp.pop %v1016
    %v1018 = vmul.f32 %v1016, %v1017
    %v1019 = vsub.f32 1.0, %v1018
    %v1020 = vmul.f32 %v1017, %v1019
    %v1021 = vadd.f32 %v1017, %v1020
    %vm1022 = vweird.f32 %v1016
    %vm1023 = vweird.f32 %v1017
    %vm1024 = vmor %vm1022, %vm1023
    %v1025 = vsel %vm1024, %v1017, %v1021
    %v1026 = vand.u32 2147483647, %v1016
    %vm1027 = vcmp.eq.f32.partialorder %v1026, 8.507059e+37
    %v1028 = vand.u32 %v1016, 2147483648
    %v1029 = vor.u32 1.1754944e-38, %v1028
    %v1030 = vsel %vm1027, %v1029, %v1025
    %v1031 = vmul.f32 1.0, %v1030
    %v1032 = vtanh.pop %v992
    %v1033 = vxor.u32 %v993, 2147483648
    %v1034 = vmul.f32 %v1033, 1.442695
    %v1035 = vpow.pop %v1034
    %v1036 = vadd.f32 %v1035, 1.0
    %v1037 = vrcp.pop %v1036
    %v1038 = vmul.f32 %v1036, %v1037
    %v1039 = vsub.f32 1.0, %v1038
    %v1040 = vmul.f32 %v1037, %v1039
    %v1041 = vadd.f32 %v1037, %v1040
    %vm1042 = vweird.f32 %v1036
    %vm1043 = vweird.f32 %v1037
    %vm1044 = vmor %vm1042, %vm1043
    %v1045 = vsel %vm1044, %v1037, %v1041
    %v1046 = vand.u32 2147483647, %v1036
    %vm1047 = vcmp.eq.f32.partialorder %v1046, 8.507059e+37
    %v1048 = vand.u32 %v1036, 2147483648
    %v1049 = vor.u32 1.1754944e-38, %v1048
    %v1050 = vsel %vm1047, %v1049, %v1045
    %v1051 = vmul.f32 1.0, %v1050
    %v1053 = vrot.slane %v900, 6
    %v1055 = vmul.f32 %v1031, %v1053
    %v1056 = vmul.f32 %v1012, %v1032
    %v1057 = vadd.f32 %v1055, %v1056
    %v1058 = vtanh.pop %v1057
    %v1059 = vmul.f32 %v1051, %v1058
    %v1060 = vld [vmem:[#allocation2 + $0x20] sm:$0xc]
    %v1061 = vld [vmem:[#allocation2 + $0x28] sm:$0xc]
    %v1062 = vld [vmem:[#allocation2 + $0x30] sm:$0xc]
    %v1063 = vld [vmem:[#allocation2 + $0x38] sm:$0xc]
    %1064 = vmatpush.msra.mxu0 %v248
    %1065 = vmatpush.msra.mxu0 %v244
    %1066 = vmatpush.msra.mxu0 %v240
    %1067 = vmatpush.msra.mxu0 %v236
    %1068 = vmatpush.msra.mxu0 %v232
    %1069 = vmatpush.msra.mxu0 %v228
    %1070 = vmatpush.msra.mxu0 %v224
    %1071 = vmatpush.msra.mxu0 %v220
    %1072 = vmatpush.msra.mxu0 %v216
    %1073 = vmatpush.msra.mxu0 %v212
    %1074 = vmatpush.msra.mxu0 %v208
    %1075 = vmatpush.msra.mxu0 %v204
    %1076 = vmatpush.msra.mxu0 %v200
    %1077 = vmatpush.msra.mxu0 %v196
    %1078 = vmatpush.msra.mxu0 %v192
    %1079 = vmatpush.msra.mxu0 %v188
    %1080 = vmatmul.f32.gmra.mxu0 %v1059
    %v1081 = vpop.f32.mrf.mxu0
    %v1082 = vadd.f32 0.0, %v1081
    %1083 = vdwg.mxu0
    %1084 = vmatpush.msra.mxu0 %v249
    %1085 = vmatpush.msra.mxu0 %v245
    %1086 = vmatpush.msra.mxu0 %v241
    %1087 = vmatpush.msra.mxu0 %v237
    %1088 = vmatpush.msra.mxu0 %v233
    %1089 = vmatpush.msra.mxu0 %v229
    %1090 = vmatpush.msra.mxu0 %v225
    %1091 = vmatpush.msra.mxu0 %v221
    %1092 = vmatpush.msra.mxu0 %v217
    %1093 = vmatpush.msra.mxu0 %v213
    %1094 = vmatpush.msra.mxu0 %v209
    %1095 = vmatpush.msra.mxu0 %v205
    %1096 = vmatpush.msra.mxu0 %v201
    %1097 = vmatpush.msra.mxu0 %v197
    %1098 = vmatpush.msra.mxu0 %v193
    %1099 = vmatpush.msra.mxu0 %v189
    %1100 = vmatmul.f32.gmra.mxu0 %v1059
    %v1101 = vpop.f32.mrf.mxu0
    %v1102 = vadd.f32 0.0, %v1101
    %1103 = vdwg.mxu0
    %1104 = vmatpush.msra.mxu0 %v250
    %1105 = vmatpush.msra.mxu0 %v246
    %1106 = vmatpush.msra.mxu0 %v242
    %1107 = vmatpush.msra.mxu0 %v238
    %1108 = vmatpush.msra.mxu0 %v234
    %1109 = vmatpush.msra.mxu0 %v230
    %1110 = vmatpush.msra.mxu0 %v226
    %1111 = vmatpush.msra.mxu0 %v222
    %1112 = vmatpush.msra.mxu0 %v218
    %1113 = vmatpush.msra.mxu0 %v214
    %1114 = vmatpush.msra.mxu0 %v210
    %1115 = vmatpush.msra.mxu0 %v206
    %1116 = vmatpush.msra.mxu0 %v202
    %1117 = vmatpush.msra.mxu0 %v198
    %1118 = vmatpush.msra.mxu0 %v194
    %1119 = vmatpush.msra.mxu0 %v190
    %1120 = vmatmul.f32.gmra.mxu0 %v1059
    %v1121 = vpop.f32.mrf.mxu0
    %v1122 = vadd.f32 0.0, %v1121
    %1123 = vdwg.mxu0
    %1124 = vmatpush.msra.mxu0 %v251
    %1125 = vmatpush.msra.mxu0 %v247
    %1126 = vmatpush.msra.mxu0 %v243
    %1127 = vmatpush.msra.mxu0 %v239
    %1128 = vmatpush.msra.mxu0 %v235
    %1129 = vmatpush.msra.mxu0 %v231
    %1130 = vmatpush.msra.mxu0 %v227
    %1131 = vmatpush.msra.mxu0 %v223
    %1132 = vmatpush.msra.mxu0 %v219
    %1133 = vmatpush.msra.mxu0 %v215
    %1134 = vmatpush.msra.mxu0 %v211
    %1135 = vmatpush.msra.mxu0 %v207
    %1136 = vmatpush.msra.mxu0 %v203
    %1137 = vmatpush.msra.mxu0 %v199
    %1138 = vmatpush.msra.mxu0 %v195
    %1139 = vmatpush.msra.mxu0 %v191
    %1140 = vmatmul.f32.gmra.mxu0 %v1059
    %v1141 = vpop.f32.mrf.mxu0
    %v1142 = vadd.f32 0.0, %v1141
    %1143 = vdwg.mxu0
    %v1148 = vrot.slane %v1082, 6
    %v1149 = vrot.slane %v1102, 6
    %v1150 = vrot.slane %v1122, 6
    %v1151 = vrot.slane %v1142, 6
    %v1156 = vadd.f32 %v1060, %v1148
    %v1157 = vadd.f32 %v1061, %v1149
    %v1158 = vadd.f32 %v1062, %v1150
    %v1159 = vadd.f32 %v1063, %v1151
    %v1160 = vxor.u32 %v1156, 2147483648
    %v1161 = vmul.f32 %v1160, 1.442695
    %v1162 = vpow.pop %v1161
    %v1163 = vadd.f32 %v1162, 1.0
    %v1164 = vrcp.pop %v1163
    %v1165 = vmul.f32 %v1163, %v1164
    %v1166 = vsub.f32 1.0, %v1165
    %v1167 = vmul.f32 %v1164, %v1166
    %v1168 = vadd.f32 %v1164, %v1167
    %vm1169 = vweird.f32 %v1163
    %vm1170 = vweird.f32 %v1164
    %vm1171 = vmor %vm1169, %vm1170
    %v1172 = vsel %vm1171, %v1164, %v1168
    %v1173 = vand.u32 2147483647, %v1163
    %vm1174 = vcmp.eq.f32.partialorder %v1173, 8.507059e+37
    %v1175 = vand.u32 %v1163, 2147483648
    %v1176 = vor.u32 1.1754944e-38, %v1175
    %v1177 = vsel %vm1174, %v1176, %v1172
    %v1178 = vmul.f32 1.0, %v1177
    %v1179 = vxor.u32 %v1157, 2147483648
    %v1180 = vmul.f32 %v1179, 1.442695
    %v1181 = vpow.pop %v1180
    %v1182 = vadd.f32 %v1181, 1.0
    %v1183 = vrcp.pop %v1182
    %v1184 = vmul.f32 %v1182, %v1183
    %v1185 = vsub.f32 1.0, %v1184
    %v1186 = vmul.f32 %v1183, %v1185
    %v1187 = vadd.f32 %v1183, %v1186
    %vm1188 = vweird.f32 %v1182
    %vm1189 = vweird.f32 %v1183
    %vm1190 = vmor %vm1188, %vm1189
    %v1191 = vsel %vm1190, %v1183, %v1187
    %v1192 = vand.u32 2147483647, %v1182
    %vm1193 = vcmp.eq.f32.partialorder %v1192, 8.507059e+37
    %v1194 = vand.u32 %v1182, 2147483648
    %v1195 = vor.u32 1.1754944e-38, %v1194
    %v1196 = vsel %vm1193, %v1195, %v1191
    %v1197 = vmul.f32 1.0, %v1196
    %v1198 = vtanh.pop %v1158
    %v1199 = vxor.u32 %v1159, 2147483648
    %v1200 = vmul.f32 %v1199, 1.442695
    %v1201 = vpow.pop %v1200
    %v1202 = vadd.f32 %v1201, 1.0
    %v1203 = vrcp.pop %v1202
    %v1204 = vmul.f32 %v1202, %v1203
    %v1205 = vsub.f32 1.0, %v1204
    %v1206 = vmul.f32 %v1203, %v1205
    %v1207 = vadd.f32 %v1203, %v1206
    %vm1208 = vweird.f32 %v1202
    %vm1209 = vweird.f32 %v1203
    %vm1210 = vmor %vm1208, %vm1209
    %v1211 = vsel %vm1210, %v1203, %v1207
    %v1212 = vand.u32 2147483647, %v1202
    %vm1213 = vcmp.eq.f32.partialorder %v1212, 8.507059e+37
    %v1214 = vand.u32 %v1202, 2147483648
    %v1215 = vor.u32 1.1754944e-38, %v1214
    %v1216 = vsel %vm1213, %v1215, %v1211
    %v1217 = vmul.f32 1.0, %v1216
    %v1219 = vrot.slane %v1057, 6
    %v1221 = vmul.f32 %v1197, %v1219
    %v1222 = vmul.f32 %v1178, %v1198
    %v1223 = vadd.f32 %v1221, %v1222
    %v1224 = vtanh.pop %v1223
    %v1225 = vmul.f32 %v1217, %v1224
    %v1226 = vld [vmem:[#allocation2 + $0x20] sm:$0x30]
    %v1227 = vld [vmem:[#allocation2 + $0x28] sm:$0x30]
    %v1228 = vld [vmem:[#allocation2 + $0x30] sm:$0x30]
    %v1229 = vld [vmem:[#allocation2 + $0x38] sm:$0x30]
    %v1231 = vrot.slane %v1225, 2
    %1233 = vmatpush.msra.mxu0 %v248
    %1234 = vmatpush.msra.mxu0 %v244
    %1235 = vmatpush.msra.mxu0 %v240
    %1236 = vmatpush.msra.mxu0 %v236
    %1237 = vmatpush.msra.mxu0 %v232
    %1238 = vmatpush.msra.mxu0 %v228
    %1239 = vmatpush.msra.mxu0 %v224
    %1240 = vmatpush.msra.mxu0 %v220
    %1241 = vmatpush.msra.mxu0 %v216
    %1242 = vmatpush.msra.mxu0 %v212
    %1243 = vmatpush.msra.mxu0 %v208
    %1244 = vmatpush.msra.mxu0 %v204
    %1245 = vmatpush.msra.mxu0 %v200
    %1246 = vmatpush.msra.mxu0 %v196
    %1247 = vmatpush.msra.mxu0 %v192
    %1248 = vmatpush.msra.mxu0 %v188
    %1249 = vmatmul.f32.gmra.mxu0 %v1231
    %v1250 = vpop.f32.mrf.mxu0
    %v1251 = vadd.f32 0.0, %v1250
    %1252 = vdwg.mxu0
    %1253 = vmatpush.msra.mxu0 %v249
    %1254 = vmatpush.msra.mxu0 %v245
    %1255 = vmatpush.msra.mxu0 %v241
    %1256 = vmatpush.msra.mxu0 %v237
    %1257 = vmatpush.msra.mxu0 %v233
    %1258 = vmatpush.msra.mxu0 %v229
    %1259 = vmatpush.msra.mxu0 %v225
    %1260 = vmatpush.msra.mxu0 %v221
    %1261 = vmatpush.msra.mxu0 %v217
    %1262 = vmatpush.msra.mxu0 %v213
    %1263 = vmatpush.msra.mxu0 %v209
    %1264 = vmatpush.msra.mxu0 %v205
    %1265 = vmatpush.msra.mxu0 %v201
    %1266 = vmatpush.msra.mxu0 %v197
    %1267 = vmatpush.msra.mxu0 %v193
    %1268 = vmatpush.msra.mxu0 %v189
    %1269 = vmatmul.f32.gmra.mxu0 %v1231
    %v1270 = vpop.f32.mrf.mxu0
    %v1271 = vadd.f32 0.0, %v1270
    %1272 = vdwg.mxu0
    %1273 = vmatpush.msra.mxu0 %v250
    %1274 = vmatpush.msra.mxu0 %v246
    %1275 = vmatpush.msra.mxu0 %v242
    %1276 = vmatpush.msra.mxu0 %v238
    %1277 = vmatpush.msra.mxu0 %v234
    %1278 = vmatpush.msra.mxu0 %v230
    %1279 = vmatpush.msra.mxu0 %v226
    %1280 = vmatpush.msra.mxu0 %v222
    %1281 = vmatpush.msra.mxu0 %v218
    %1282 = vmatpush.msra.mxu0 %v214
    %1283 = vmatpush.msra.mxu0 %v210
    %1284 = vmatpush.msra.mxu0 %v206
    %1285 = vmatpush.msra.mxu0 %v202
    %1286 = vmatpush.msra.mxu0 %v198
    %1287 = vmatpush.msra.mxu0 %v194
    %1288 = vmatpush.msra.mxu0 %v190
    %1289 = vmatmul.f32.gmra.mxu0 %v1231
    %v1290 = vpop.f32.mrf.mxu0
    %v1291 = vadd.f32 0.0, %v1290
    %1292 = vdwg.mxu0
    %1293 = vmatpush.msra.mxu0 %v251
    %1294 = vmatpush.msra.mxu0 %v247
    %1295 = vmatpush.msra.mxu0 %v243
    %1296 = vmatpush.msra.mxu0 %v239
    %1297 = vmatpush.msra.mxu0 %v235
    %1298 = vmatpush.msra.mxu0 %v231
    %1299 = vmatpush.msra.mxu0 %v227
    %1300 = vmatpush.msra.mxu0 %v223
    %1301 = vmatpush.msra.mxu0 %v219
    %1302 = vmatpush.msra.mxu0 %v215
    %1303 = vmatpush.msra.mxu0 %v211
    %1304 = vmatpush.msra.mxu0 %v207
    %1305 = vmatpush.msra.mxu0 %v203
    %1306 = vmatpush.msra.mxu0 %v199
    %1307 = vmatpush.msra.mxu0 %v195
    %1308 = vmatpush.msra.mxu0 %v191
    %1309 = vmatmul.f32.gmra.mxu0 %v1231
    %v1310 = vpop.f32.mrf.mxu0
    %v1311 = vadd.f32 0.0, %v1310
    %1312 = vdwg.mxu0
    %v1317 = vrot.slane %v1251, 4
    %v1318 = vrot.slane %v1271, 4
    %v1319 = vrot.slane %v1291, 4
    %v1320 = vrot.slane %v1311, 4
    %v1325 = vadd.f32 %v1226, %v1317
    %v1326 = vadd.f32 %v1227, %v1318
    %v1327 = vadd.f32 %v1228, %v1319
    %v1328 = vadd.f32 %v1229, %v1320
    %v1329 = vxor.u32 %v1325, 2147483648
    %v1330 = vmul.f32 %v1329, 1.442695
    %v1331 = vpow.pop %v1330
    %v1332 = vadd.f32 %v1331, 1.0
    %v1333 = vrcp.pop %v1332
    %v1334 = vmul.f32 %v1332, %v1333
    %v1335 = vsub.f32 1.0, %v1334
    %v1336 = vmul.f32 %v1333, %v1335
    %v1337 = vadd.f32 %v1333, %v1336
    %vm1338 = vweird.f32 %v1332
    %vm1339 = vweird.f32 %v1333
    %vm1340 = vmor %vm1338, %vm1339
    %v1341 = vsel %vm1340, %v1333, %v1337
    %v1342 = vand.u32 2147483647, %v1332
    %vm1343 = vcmp.eq.f32.partialorder %v1342, 8.507059e+37
    %v1344 = vand.u32 %v1332, 2147483648
    %v1345 = vor.u32 1.1754944e-38, %v1344
    %v1346 = vsel %vm1343, %v1345, %v1341
    %v1347 = vmul.f32 1.0, %v1346
    %v1348 = vxor.u32 %v1326, 2147483648
    %v1349 = vmul.f32 %v1348, 1.442695
    %v1350 = vpow.pop %v1349
    %v1351 = vadd.f32 %v1350, 1.0
    %v1352 = vrcp.pop %v1351
    %v1353 = vmul.f32 %v1351, %v1352
    %v1354 = vsub.f32 1.0, %v1353
    %v1355 = vmul.f32 %v1352, %v1354
    %v1356 = vadd.f32 %v1352, %v1355
    %vm1357 = vweird.f32 %v1351
    %vm1358 = vweird.f32 %v1352
    %vm1359 = vmor %vm1357, %vm1358
    %v1360 = vsel %vm1359, %v1352, %v1356
    %v1361 = vand.u32 2147483647, %v1351
    %vm1362 = vcmp.eq.f32.partialorder %v1361, 8.507059e+37
    %v1363 = vand.u32 %v1351, 2147483648
    %v1364 = vor.u32 1.1754944e-38, %v1363
    %v1365 = vsel %vm1362, %v1364, %v1360
    %v1366 = vmul.f32 1.0, %v1365
    %v1367 = vtanh.pop %v1327
    %v1368 = vxor.u32 %v1328, 2147483648
    %v1369 = vmul.f32 %v1368, 1.442695
    %v1370 = vpow.pop %v1369
    %v1371 = vadd.f32 %v1370, 1.0
    %v1372 = vrcp.pop %v1371
    %v1373 = vmul.f32 %v1371, %v1372
    %v1374 = vsub.f32 1.0, %v1373
    %v1375 = vmul.f32 %v1372, %v1374
    %v1376 = vadd.f32 %v1372, %v1375
    %vm1377 = vweird.f32 %v1371
    %vm1378 = vweird.f32 %v1372
    %vm1379 = vmor %vm1377, %vm1378
    %v1380 = vsel %vm1379, %v1372, %v1376
    %v1381 = vand.u32 2147483647, %v1371
    %vm1382 = vcmp.eq.f32.partialorder %v1381, 8.507059e+37
    %v1383 = vand.u32 %v1371, 2147483648
    %v1384 = vor.u32 1.1754944e-38, %v1383
    %v1385 = vsel %vm1382, %v1384, %v1380
    %v1386 = vmul.f32 1.0, %v1385
    %v1388 = vrot.slane %v1223, 6
    %v1390 = vmul.f32 %v1366, %v1388
    %v1391 = vmul.f32 %v1347, %v1367
    %v1392 = vadd.f32 %v1390, %v1391
    %v1393 = vtanh.pop %v1392
    %v1394 = vmul.f32 %v1386, %v1393
    %v1395 = vld [vmem:[#allocation2 + $0x20] sm:$0xc0]
    %v1396 = vld [vmem:[#allocation2 + $0x28] sm:$0xc0]
    %v1397 = vld [vmem:[#allocation2 + $0x30] sm:$0xc0]
    %v1398 = vld [vmem:[#allocation2 + $0x38] sm:$0xc0]
    %v1400 = vrot.slane %v1394, 4
    %1402 = vmatpush.msra.mxu0 %v248
    %1403 = vmatpush.msra.mxu0 %v244
    %1404 = vmatpush.msra.mxu0 %v240
    %1405 = vmatpush.msra.mxu0 %v236
    %1406 = vmatpush.msra.mxu0 %v232
    %1407 = vmatpush.msra.mxu0 %v228
    %1408 = vmatpush.msra.mxu0 %v224
    %1409 = vmatpush.msra.mxu0 %v220
    %1410 = vmatpush.msra.mxu0 %v216
    %1411 = vmatpush.msra.mxu0 %v212
    %1412 = vmatpush.msra.mxu0 %v208
    %1413 = vmatpush.msra.mxu0 %v204
    %1414 = vmatpush.msra.mxu0 %v200
    %1415 = vmatpush.msra.mxu0 %v196
    %1416 = vmatpush.msra.mxu0 %v192
    %1417 = vmatpush.msra.mxu0 %v188
    %1418 = vmatmul.f32.gmra.mxu0 %v1400
    %v1419 = vpop.f32.mrf.mxu0
    %v1420 = vadd.f32 0.0, %v1419
    %1421 = vdwg.mxu0
    %1422 = vmatpush.msra.mxu0 %v249
    %1423 = vmatpush.msra.mxu0 %v245
    %1424 = vmatpush.msra.mxu0 %v241
    %1425 = vmatpush.msra.mxu0 %v237
    %1426 = vmatpush.msra.mxu0 %v233
    %1427 = vmatpush.msra.mxu0 %v229
    %1428 = vmatpush.msra.mxu0 %v225
    %1429 = vmatpush.msra.mxu0 %v221
    %1430 = vmatpush.msra.mxu0 %v217
    %1431 = vmatpush.msra.mxu0 %v213
    %1432 = vmatpush.msra.mxu0 %v209
    %1433 = vmatpush.msra.mxu0 %v205
    %1434 = vmatpush.msra.mxu0 %v201
    %1435 = vmatpush.msra.mxu0 %v197
    %1436 = vmatpush.msra.mxu0 %v193
    %1437 = vmatpush.msra.mxu0 %v189
    %1438 = vmatmul.f32.gmra.mxu0 %v1400
    %v1439 = vpop.f32.mrf.mxu0
    %v1440 = vadd.f32 0.0, %v1439
    %1441 = vdwg.mxu0
    %1442 = vmatpush.msra.mxu0 %v250
    %1443 = vmatpush.msra.mxu0 %v246
    %1444 = vmatpush.msra.mxu0 %v242
    %1445 = vmatpush.msra.mxu0 %v238
    %1446 = vmatpush.msra.mxu0 %v234
    %1447 = vmatpush.msra.mxu0 %v230
    %1448 = vmatpush.msra.mxu0 %v226
    %1449 = vmatpush.msra.mxu0 %v222
    %1450 = vmatpush.msra.mxu0 %v218
    %1451 = vmatpush.msra.mxu0 %v214
    %1452 = vmatpush.msra.mxu0 %v210
    %1453 = vmatpush.msra.mxu0 %v206
    %1454 = vmatpush.msra.mxu0 %v202
    %1455 = vmatpush.msra.mxu0 %v198
    %1456 = vmatpush.msra.mxu0 %v194
    %1457 = vmatpush.msra.mxu0 %v190
    %1458 = vmatmul.f32.gmra.mxu0 %v1400
    %v1459 = vpop.f32.mrf.mxu0
    %v1460 = vadd.f32 0.0, %v1459
    %1461 = vdwg.mxu0
    %1462 = vmatpush.msra.mxu0 %v251
    %1463 = vmatpush.msra.mxu0 %v247
    %1464 = vmatpush.msra.mxu0 %v243
    %1465 = vmatpush.msra.mxu0 %v239
    %1466 = vmatpush.msra.mxu0 %v235
    %1467 = vmatpush.msra.mxu0 %v231
    %1468 = vmatpush.msra.mxu0 %v227
    %1469 = vmatpush.msra.mxu0 %v223
    %1470 = vmatpush.msra.mxu0 %v219
    %1471 = vmatpush.msra.mxu0 %v215
    %1472 = vmatpush.msra.mxu0 %v211
    %1473 = vmatpush.msra.mxu0 %v207
    %1474 = vmatpush.msra.mxu0 %v203
    %1475 = vmatpush.msra.mxu0 %v199
    %1476 = vmatpush.msra.mxu0 %v195
    %1477 = vmatpush.msra.mxu0 %v191
    %1478 = vmatmul.f32.gmra.mxu0 %v1400
    %v1479 = vpop.f32.mrf.mxu0
    %v1480 = vadd.f32 0.0, %v1479
    %1481 = vdwg.mxu0
    %v1486 = vrot.slane %v1420, 2
    %v1487 = vrot.slane %v1440, 2
    %v1488 = vrot.slane %v1460, 2
    %v1489 = vrot.slane %v1480, 2
    %v1494 = vadd.f32 %v1395, %v1486
    %v1495 = vadd.f32 %v1396, %v1487
    %v1496 = vadd.f32 %v1397, %v1488
    %v1497 = vadd.f32 %v1398, %v1489
    %v1498 = vxor.u32 %v1494, 2147483648
    %v1499 = vmul.f32 %v1498, 1.442695
    %v1500 = vpow.pop %v1499
    %v1501 = vadd.f32 %v1500, 1.0
    %v1502 = vrcp.pop %v1501
    %v1503 = vmul.f32 %v1501, %v1502
    %v1504 = vsub.f32 1.0, %v1503
    %v1505 = vmul.f32 %v1502, %v1504
    %v1506 = vadd.f32 %v1502, %v1505
    %vm1507 = vweird.f32 %v1501
    %vm1508 = vweird.f32 %v1502
    %vm1509 = vmor %vm1507, %vm1508
    %v1510 = vsel %vm1509, %v1502, %v1506
    %v1511 = vand.u32 2147483647, %v1501
    %vm1512 = vcmp.eq.f32.partialorder %v1511, 8.507059e+37
    %v1513 = vand.u32 %v1501, 2147483648
    %v1514 = vor.u32 1.1754944e-38, %v1513
    %v1515 = vsel %vm1512, %v1514, %v1510
    %v1516 = vmul.f32 1.0, %v1515
    %v1517 = vxor.u32 %v1495, 2147483648
    %v1518 = vmul.f32 %v1517, 1.442695
    %v1519 = vpow.pop %v1518
    %v1520 = vadd.f32 %v1519, 1.0
    %v1521 = vrcp.pop %v1520
    %v1522 = vmul.f32 %v1520, %v1521
    %v1523 = vsub.f32 1.0, %v1522
    %v1524 = vmul.f32 %v1521, %v1523
    %v1525 = vadd.f32 %v1521, %v1524
    %vm1526 = vweird.f32 %v1520
    %vm1527 = vweird.f32 %v1521
    %vm1528 = vmor %vm1526, %vm1527
    %v1529 = vsel %vm1528, %v1521, %v1525
    %v1530 = vand.u32 2147483647, %v1520
    %vm1531 = vcmp.eq.f32.partialorder %v1530, 8.507059e+37
    %v1532 = vand.u32 %v1520, 2147483648
    %v1533 = vor.u32 1.1754944e-38, %v1532
    %v1534 = vsel %vm1531, %v1533, %v1529
    %v1535 = vmul.f32 1.0, %v1534
    %v1536 = vtanh.pop %v1496
    %v1537 = vxor.u32 %v1497, 2147483648
    %v1538 = vmul.f32 %v1537, 1.442695
    %v1539 = vpow.pop %v1538
    %v1540 = vadd.f32 %v1539, 1.0
    %v1541 = vrcp.pop %v1540
    %v1542 = vmul.f32 %v1540, %v1541
    %v1543 = vsub.f32 1.0, %v1542
    %v1544 = vmul.f32 %v1541, %v1543
    %v1545 = vadd.f32 %v1541, %v1544
    %vm1546 = vweird.f32 %v1540
    %vm1547 = vweird.f32 %v1541
    %vm1548 = vmor %vm1546, %vm1547
    %v1549 = vsel %vm1548, %v1541, %v1545
    %v1550 = vand.u32 2147483647, %v1540
    %vm1551 = vcmp.eq.f32.partialorder %v1550, 8.507059e+37
    %v1552 = vand.u32 %v1540, 2147483648
    %v1553 = vor.u32 1.1754944e-38, %v1552
    %v1554 = vsel %vm1551, %v1553, %v1549
    %v1555 = vmul.f32 1.0, %v1554
    %v1557 = vrot.slane %v1392, 6
    %v1559 = vmul.f32 %v1535, %v1557
    %v1560 = vmul.f32 %v1516, %v1536
    %v1561 = vadd.f32 %v1559, %v1560
    %v1562 = vtanh.pop %v1561
    %v1563 = vmul.f32 %v1555, %v1562
    %1564 = vst [vmem:[#allocation8 - $0x6] sm:$0xc0] %v1563
    // Predicated region
    $region26: #{tpu_custom_call.1} parent=1 // pred_check
      _
    $region27: #{tpu_custom_call.1} parent=1 // pred_check_branch
      %1566 = sbr.rel (0) target = $region29
    $region28: #{tpu_custom_call.1} parent=1 // pred_region
      %1568 = vsyncadd [#allocation5], 0
      %s1570 = sshll.u32 [#allocation8], 4
      %s1571 = int_to_ptr.vmem [resolvable:$true] %s1570
      %s1572 = sshll.u32 %s4, 4
      %s1573 = int_to_ptr.hbm [resolvable:$true] %s1572
      %1575 = dma.vmem_to_hbm [thread:$0]  %s1571, 32, %s1573, [#allocation5]
    $region29: #{tpu_custom_call.1} parent=1 // pred_fallthru
      _
    // Predicated region
    $region30: #{tpu_custom_call.1} parent=1 // pred_check
      _
    $region31: #{tpu_custom_call.1} parent=1 // pred_check_branch
      %1577 = sbr.rel (0) target = $region33
    $region32: #{tpu_custom_call.1} parent=1 // pred_region
      %1579 = dma.done [#allocation5], 32
    $region33: #{tpu_custom_call.1} parent=1 // pred_fallthru
      _
    %1580 = vsyncpa [#allocation4], 1
    %1581 = vsyncpa [#allocation7], 1
    %1582 = vsyncpa [#allocation5], 1

</llo_original>
